<compile_context>
chip_gen: v7x
topology: tpu7x:2x2x1
jax: 0.10.0
libtpu: 0.0.40
codegen_flags: <defaults>
</compile_context>

<pallas_src>
import functools

import jax
import jax.numpy as jnp
import numpy as np
from jax.experimental import pallas as pl
from jax.experimental.pallas import tpu as pltpu

_LANE = 128
_SUB = 8


def _round_up(x, m):
    return ((x + m - 1) // m) * m


def _vmem_capacity_bytes():
    """Per-core VMEM capacity; conservative v7x-sized fallback."""
    try:
        cap = getattr(pltpu.get_tpu_info(), "vmem_capacity_bytes", None)
        if cap:
            return int(cap)
    except Exception:
        pass
    return 64 << 20


def _rsoftmax_kernel(r_ref, x_ref, o_ref, *, eps, n_valid, csub):
    x = x_ref[...].astype(jnp.float32)                     # (TB, Np)
    TB, Np = x.shape
    r = r_ref[0]                                           # scalar in SMEM

    NEG = jnp.float32(-1e30)
    POS = jnp.float32(1e30)
    n_f = jnp.float32(n_valid)

    lane = jax.lax.broadcasted_iota(jnp.int32, (TB, Np), 1)
    valid = lane < n_valid                                 # (TB, Np) bool

    # ---- calculate_t ----
    xv = jnp.where(valid, x, NEG)
    maxes = jnp.max(xv, axis=-1, keepdims=True)            # (TB, 1)
    xm = x - maxes                                         # (TB, Np)
    zeros_mask = jnp.logical_and(
        jnp.exp(jnp.where(valid, xm, 0.0)) == 0.0, valid)  # exp underflow
    zeros_frac = jnp.sum(zeros_mask.astype(jnp.float32), axis=-1,
                         keepdims=True) / n_f              # (TB, 1)
    denom_q = jnp.maximum(1.0 - zeros_frac, jnp.float32(1e-12))  # 0/0 guard
    q = jnp.clip((r - zeros_frac) / denom_q, 0.0, 1.0)     # (TB, 1)

    # x_minus_maxes * (~zeros_mask); padded lanes pushed to +big so they sort
    # last and never perturb counts / selection for ranks < n_valid.
    # All valid values are <= 0, so +1e30 is strictly larger than any of them.
    xsel = jnp.where(valid, jnp.where(zeros_mask, 0.0, xm), POS)  # (TB, Np)

    # ---- rank counting: cnt_lt[i] = #{ j : xsel[j] < xsel[i] } ----
    # Target axis i stays on lanes.  Comparands are pulled csub-at-a-time from
    # a once-relayouted copy (feature axis on sublanes); each chunk is a pure
    # VALU compare+add into a (TB, csub, Np) partial, reduced over sublanes
    # ONCE after the loop.
    xsel_j = xsel[:, :, None]                              # (TB, Np, 1) hoisted
    xi = xsel[:, None, :]                                  # (TB, 1, Np)
    partial = jnp.zeros((TB, csub, Np), jnp.float32)
    for c0 in range(0, Np, csub):                          # static trip count
        xj = xsel_j[:, c0:c0 + csub, :]                    # (TB, csub, 1)
        partial = partial + (xj < xi).astype(jnp.float32)  # (TB, csub, Np)
    cnt_lt = jnp.sum(partial, axis=1)                      # (TB, Np)

    # torch.quantile(..., 'linear'): pos = q*(n-1), lerp between order stats.
    pos = q * (n_f - 1.0)                                  # (TB, 1)
    k0 = jnp.floor(pos)
    frac = pos - k0
    k1 = jnp.minimum(jnp.ceil(pos), n_f - 1.0)
    # Order statistic k == max over { i : cnt_lt[i] <= k } of xsel.
    v0 = jnp.max(jnp.where(cnt_lt <= k0, xsel, NEG), axis=-1, keepdims=True)
    v1 = jnp.max(jnp.where(cnt_lt <= k1, xsel, NEG), axis=-1, keepdims=True)
    quant = v0 + frac * (v1 - v0)                          # (TB, 1)
    t = -quant + eps                                       # (TB, 1)

    # ---- t_softmax ----
    w = jnp.maximum(xm + t, 0.0) + 1e-8
    logits = jnp.where(valid, xm + jnp.log(w), NEG)
    m2 = jnp.max(logits, axis=-1, keepdims=True)
    e = jnp.where(valid, jnp.exp(logits - m2), 0.0)
    o_ref[...] = (e / jnp.sum(e, axis=-1, keepdims=True)).astype(o_ref.dtype)


def rsoftmax_pallas(x, r, eps=1e-8, tile_b=None):
    """RSoftmax forward over the last axis of x (any leading shape)."""
    orig_shape = x.shape
    N = orig_shape[-1]
    x2 = x.reshape((-1, N))
    B = x2.shape[0]

    # Lane-dense output: pad the feature axis up to a multiple of 128.
    Np = max(_LANE, _round_up(N, _LANE))

    # Comparand sublane-block: power of two (so it divides Np), grown only to
    # keep the statically-unrolled chunk loop at <= ~32 iterations.
    csub = _SUB
    while csub < 64 and Np // csub > 32:
        csub *= 2

    # Row tile: sized so the in-kernel temporaries (dominant: the
    # (tile_b, csub, Np) partial/mask pair) plus the double-buffered I/O
    # blocks fit the per-generation VMEM budget.
    itemsize = jnp.dtype(x.dtype).itemsize
    capacity = _vmem_capacity_bytes()
    temp_budget = min(capacity // 4, 32 << 20)             # 16 MiB on v7x
    per_row = (2 * csub + 14) * Np * 4 + 4 * Np * itemsize
    tile_b_max = min(512, max(_SUB, (temp_budget // per_row) // _SUB * _SUB))

    b8 = _round_up(B, _SUB)
    if tile_b is None:
        tile_b = min(tile_b_max, b8)
        # v7x has 2 TensorCores: keep >= 2 steps on the parallel axis when
        # there are enough rows to split.
        if tile_b >= b8 and b8 >= 2 * _SUB:
            tile_b = _round_up(b8 // 2, _SUB)
    else:
        tile_b = max(_SUB, _round_up(tile_b, _SUB))

    Bp = _round_up(B, tile_b)
    if (Bp, Np) != (B, N):
        x2 = jnp.pad(x2, ((0, Bp - B), (0, Np - N)))

    est = per_row * tile_b + (1 << 20)
    vmem_limit = int(min(capacity * 7 // 8, max(32 << 20, 2 * est)))

    r_arr = jnp.asarray(r, jnp.float32).reshape((1,))

    out = pl.pallas_call(
        functools.partial(_rsoftmax_kernel, eps=eps, n_valid=N, csub=csub),
        out_shape=jax.ShapeDtypeStruct((Bp, Np), x.dtype),
        grid=(Bp // tile_b,),
        in_specs=[
            pl.BlockSpec((1,), lambda i: (0,),
                         memory_space=pltpu.MemorySpace.SMEM),   # r scalar
            pl.BlockSpec((tile_b, Np), lambda i: (i, 0)),        # x row tile
        ],
        out_specs=pl.BlockSpec((tile_b, Np), lambda i: (i, 0)),
        compiler_params=pltpu.CompilerParams(
            dimension_semantics=("parallel",),
            vmem_limit_bytes=vmem_limit),
    )(r_arr, x2)

    return out[:B, :N].reshape(orig_shape)


def rsoftmax_ref(x, r, eps=1e-8):
    """Pure-JAX reference mirroring the PyTorch module (dim=-1, 2-D x)."""
    maxes = jnp.max(x, axis=-1, keepdims=True)
    xm = x - maxes
    zm = jnp.exp(xm) == 0.0
    zf = jnp.sum(zm, axis=-1, keepdims=True).astype(jnp.float32) / x.shape[-1]
    q = jnp.clip((r - zf) / (1.0 - zf), 0.0, 1.0)
    xmask = xm * (~zm).astype(x.dtype)
    t = -jax.vmap(lambda row, qq: jnp.quantile(row, qq))(xmask, q[:, 0]) + eps
    t = t[:, None]
    w = jax.nn.relu(xm + t) + 1e-8
    return jax.nn.softmax(xm + jnp.log(w), axis=-1)


if __name__ == "__main__":
    key = jax.random.PRNGKey(0)

    # Case 1: exercises both batch-padding (6 -> 8) and lane-padding (96 -> 128).
    B1, N1 = 6, 96
    x1 = jax.random.normal(key, (B1, N1), dtype=jnp.float32) * 3.0
    r1 = 0.3
    out1 = jax.block_until_ready(rsoftmax_pallas(x1, r1))
    ref1 = rsoftmax_ref(x1, r1)
    np.testing.assert_allclose(np.asarray(out1), np.asarray(ref1),
                               rtol=1e-5, atol=1e-5)
    np.testing.assert_allclose(np.asarray(out1).sum(-1), np.ones(B1),
                               rtol=1e-5, atol=1e-5)

    # Case 2: exact tile sizes, large scale to exercise the exp-underflow mask.
    B2, N2 = 8, 128
    x2 = jax.random.normal(jax.random.PRNGKey(1), (B2, N2),
                           dtype=jnp.float32) * 40.0
    r2 = 0.75
    out2 = jax.block_until_ready(rsoftmax_pallas(x2, r2))
    ref2 = rsoftmax_ref(x2, r2)
    np.testing.assert_allclose(np.asarray(out2), np.asarray(ref2),
                               rtol=1e-5, atol=1e-5)
    np.testing.assert_allclose(np.asarray(out2).sum(-1), np.ones(B2),
                               rtol=1e-5, atol=1e-5)

    # Case 3: larger batch -> adaptive row tile + multi-step parallel grid.
    B3, N3 = 300, 40
    x3 = jax.random.normal(jax.random.PRNGKey(2), (B3, N3),
                           dtype=jnp.float32) * 5.0
    r3 = 0.5
    out3 = jax.block_until_ready(rsoftmax_pallas(x3, r3))
    ref3 = rsoftmax_ref(x3, r3)
    np.testing.assert_allclose(np.asarray(out3), np.asarray(ref3),
                               rtol=1e-5, atol=1e-5)
    np.testing.assert_allclose(np.asarray(out3).sum(-1), np.ones(B3),
                               rtol=1e-5, atol=1e-5)

    print("KERNEL_OK")
</pallas_src>

<mosaic_0001>
module attributes {stable_mosaic.version = 11 : i64} {
  func.func @_rsoftmax_kernel(%arg0: i32, %arg1: memref<1xf32, #tpu.memory_space<smem>>, %arg2: memref<8x128xf32, #tpu.memory_space<vmem>>, %arg3: memref<8x128xf32, #tpu.memory_space<vmem>>) attributes {dimension_semantics = [#tpu.dimension_semantics<parallel>], iteration_bounds = array<i64: 1>, scalar_prefetch = 0 : i64, scratch_operands = 0 : i64, tpu.core_type = #tpu.core_type<tc>, window_params = [{transform_indices = @transform_0, window_bounds = array<i64: 1>}, {transform_indices = @transform_1, window_bounds = array<i64: 8, 128>}, {transform_indices = @transform_2, window_bounds = array<i64: 8, 128>}]} {
    %c0 = arith.constant 0 : index
    %c0_0 = arith.constant 0 : index
    %0 = vector.load %arg2[%c0, %c0_0] : memref<8x128xf32, #tpu.memory_space<vmem>>, vector<8x128xf32>
    %c0_1 = arith.constant 0 : index
    %1 = memref.load %arg1[%c0_1] : memref<1xf32, #tpu.memory_space<smem>>
    %2 = tpu.iota {dimensions = array<i32: 1>} : vector<8x128xi32>
    %c96_i32 = arith.constant 96 : i32
    %3 = vector.broadcast %c96_i32 : i32 to vector<8x128xi32>
    %4 = arith.cmpi slt, %2, %3 : vector<8x128xi32>
    %cst = arith.constant -1.000000e+30 : f32
    %5 = vector.broadcast %cst : f32 to vector<8x128xf32>
    %6 = arith.select %4, %0, %5 : vector<8x128xi1>, vector<8x128xf32>
    %cst_2 = arith.constant dense<0xFF800000> : vector<8xf32>
    %7 = vector.multi_reduction <maximumf>, %6, %cst_2 [1] : vector<8x128xf32> to vector<8xf32>
    %8 = vector.shape_cast %7 : vector<8xf32> to vector<8x1xf32>
    %9 = vector.broadcast %8 : vector<8x1xf32> to vector<8x128xf32>
    %10 = arith.subf %0, %9 : vector<8x128xf32>
    %cst_3 = arith.constant 0.000000e+00 : f32
    %11 = vector.broadcast %cst_3 : f32 to vector<8x128xf32>
    %12 = arith.select %4, %10, %11 : vector<8x128xi1>, vector<8x128xf32>
    %13 = math.exp %12 : vector<8x128xf32>
    %cst_4 = arith.constant 0.000000e+00 : f32
    %14 = vector.broadcast %cst_4 : f32 to vector<8x128xf32>
    %15 = arith.cmpf oeq, %13, %14 : vector<8x128xf32>
    %16 = arith.andi %15, %4 : vector<8x128xi1>
    %17 = arith.extui %16 : vector<8x128xi1> to vector<8x128xi32>
    %18 = arith.sitofp %17 : vector<8x128xi32> to vector<8x128xf32>
    %cst_5 = arith.constant dense<0.000000e+00> : vector<8xf32>
    %19 = vector.multi_reduction <add>, %18, %cst_5 [1] : vector<8x128xf32> to vector<8xf32>
    %20 = vector.shape_cast %19 : vector<8xf32> to vector<8x1xf32>
    %cst_6 = arith.constant 9.600000e+01 : f32
    %21 = vector.broadcast %cst_6 : f32 to vector<8x1xf32>
    %22 = arith.divf %20, %21 : vector<8x1xf32>
    %cst_7 = arith.constant 1.000000e+00 : f32
    %23 = vector.broadcast %cst_7 : f32 to vector<8x1xf32>
    %24 = arith.subf %23, %22 : vector<8x1xf32>
    %cst_8 = arith.constant 9.99999996E-13 : f32
    %25 = vector.broadcast %cst_8 : f32 to vector<8x1xf32>
    %26 = arith.maximumf %24, %25 : vector<8x1xf32>
    %27 = vector.broadcast %1 : f32 to vector<8x1xf32>
    %28 = arith.subf %27, %22 : vector<8x1xf32>
    %29 = arith.divf %28, %26 : vector<8x1xf32>
    %cst_9 = arith.constant 0.000000e+00 : f32
    %cst_10 = arith.constant 1.000000e+00 : f32
    %30 = vector.broadcast %cst_9 : f32 to vector<8x1xf32>
    %31 = arith.maximumf %30, %29 : vector<8x1xf32>
    %32 = vector.broadcast %cst_10 : f32 to vector<8x1xf32>
    %33 = arith.minimumf %32, %31 : vector<8x1xf32>
    %cst_11 = arith.constant 0.000000e+00 : f32
    %34 = vector.broadcast %cst_11 : f32 to vector<8x128xf32>
    %35 = arith.select %16, %34, %10 : vector<8x128xi1>, vector<8x128xf32>
    %cst_12 = arith.constant 1.000000e+30 : f32
    %36 = vector.broadcast %cst_12 : f32 to vector<8x128xf32>
    %37 = arith.select %4, %35, %36 : vector<8x128xi1>, vector<8x128xf32>
    %38 = vector.shape_cast %37 : vector<8x128xf32> to vector<8x128x1xf32>
    %39 = vector.shape_cast %37 : vector<8x128xf32> to vector<8x1x128xf32>
    %cst_13 = arith.constant 0.000000e+00 : f32
    %40 = vector.broadcast %cst_13 : f32 to vector<8x8x128xf32>
    %41 = vector.extract_strided_slice %38 {offsets = [0, 0, 0], sizes = [8, 8, 1], strides = [1, 1, 1]} : vector<8x128x1xf32> to vector<8x8x1xf32>
    %42 = vector.broadcast %41 : vector<8x8x1xf32> to vector<8x8x128xf32>
    %43 = vector.broadcast %39 : vector<8x1x128xf32> to vector<8x8x128xf32>
    %44 = arith.cmpf olt, %42, %43 : vector<8x8x128xf32>
    %45 = arith.extui %44 : vector<8x8x128xi1> to vector<8x8x128xi32>
    %46 = arith.sitofp %45 : vector<8x8x128xi32> to vector<8x8x128xf32>
    %47 = arith.addf %40, %46 : vector<8x8x128xf32>
    %48 = vector.extract_strided_slice %38 {offsets = [0, 8, 0], sizes = [8, 8, 1], strides = [1, 1, 1]} : vector<8x128x1xf32> to vector<8x8x1xf32>
    %49 = vector.broadcast %48 : vector<8x8x1xf32> to vector<8x8x128xf32>
    %50 = vector.broadcast %39 : vector<8x1x128xf32> to vector<8x8x128xf32>
    %51 = arith.cmpf olt, %49, %50 : vector<8x8x128xf32>
    %52 = arith.extui %51 : vector<8x8x128xi1> to vector<8x8x128xi32>
    %53 = arith.sitofp %52 : vector<8x8x128xi32> to vector<8x8x128xf32>
    %54 = arith.addf %47, %53 : vector<8x8x128xf32>
    %55 = vector.extract_strided_slice %38 {offsets = [0, 16, 0], sizes = [8, 8, 1], strides = [1, 1, 1]} : vector<8x128x1xf32> to vector<8x8x1xf32>
    %56 = vector.broadcast %55 : vector<8x8x1xf32> to vector<8x8x128xf32>
    %57 = vector.broadcast %39 : vector<8x1x128xf32> to vector<8x8x128xf32>
    %58 = arith.cmpf olt, %56, %57 : vector<8x8x128xf32>
    %59 = arith.extui %58 : vector<8x8x128xi1> to vector<8x8x128xi32>
    %60 = arith.sitofp %59 : vector<8x8x128xi32> to vector<8x8x128xf32>
    %61 = arith.addf %54, %60 : vector<8x8x128xf32>
    %62 = vector.extract_strided_slice %38 {offsets = [0, 24, 0], sizes = [8, 8, 1], strides = [1, 1, 1]} : vector<8x128x1xf32> to vector<8x8x1xf32>
    %63 = vector.broadcast %62 : vector<8x8x1xf32> to vector<8x8x128xf32>
    %64 = vector.broadcast %39 : vector<8x1x128xf32> to vector<8x8x128xf32>
    %65 = arith.cmpf olt, %63, %64 : vector<8x8x128xf32>
    %66 = arith.extui %65 : vector<8x8x128xi1> to vector<8x8x128xi32>
    %67 = arith.sitofp %66 : vector<8x8x128xi32> to vector<8x8x128xf32>
    %68 = arith.addf %61, %67 : vector<8x8x128xf32>
    %69 = vector.extract_strided_slice %38 {offsets = [0, 32, 0], sizes = [8, 8, 1], strides = [1, 1, 1]} : vector<8x128x1xf32> to vector<8x8x1xf32>
    %70 = vector.broadcast %69 : vector<8x8x1xf32> to vector<8x8x128xf32>
    %71 = vector.broadcast %39 : vector<8x1x128xf32> to vector<8x8x128xf32>
    %72 = arith.cmpf olt, %70, %71 : vector<8x8x128xf32>
    %73 = arith.extui %72 : vector<8x8x128xi1> to vector<8x8x128xi32>
    %74 = arith.sitofp %73 : vector<8x8x128xi32> to vector<8x8x128xf32>
    %75 = arith.addf %68, %74 : vector<8x8x128xf32>
    %76 = vector.extract_strided_slice %38 {offsets = [0, 40, 0], sizes = [8, 8, 1], strides = [1, 1, 1]} : vector<8x128x1xf32> to vector<8x8x1xf32>
    %77 = vector.broadcast %76 : vector<8x8x1xf32> to vector<8x8x128xf32>
    %78 = vector.broadcast %39 : vector<8x1x128xf32> to vector<8x8x128xf32>
    %79 = arith.cmpf olt, %77, %78 : vector<8x8x128xf32>
    %80 = arith.extui %79 : vector<8x8x128xi1> to vector<8x8x128xi32>
    %81 = arith.sitofp %80 : vector<8x8x128xi32> to vector<8x8x128xf32>
    %82 = arith.addf %75, %81 : vector<8x8x128xf32>
    %83 = vector.extract_strided_slice %38 {offsets = [0, 48, 0], sizes = [8, 8, 1], strides = [1, 1, 1]} : vector<8x128x1xf32> to vector<8x8x1xf32>
    %84 = vector.broadcast %83 : vector<8x8x1xf32> to vector<8x8x128xf32>
    %85 = vector.broadcast %39 : vector<8x1x128xf32> to vector<8x8x128xf32>
    %86 = arith.cmpf olt, %84, %85 : vector<8x8x128xf32>
    %87 = arith.extui %86 : vector<8x8x128xi1> to vector<8x8x128xi32>
    %88 = arith.sitofp %87 : vector<8x8x128xi32> to vector<8x8x128xf32>
    %89 = arith.addf %82, %88 : vector<8x8x128xf32>
    %90 = vector.extract_strided_slice %38 {offsets = [0, 56, 0], sizes = [8, 8, 1], strides = [1, 1, 1]} : vector<8x128x1xf32> to vector<8x8x1xf32>
    %91 = vector.broadcast %90 : vector<8x8x1xf32> to vector<8x8x128xf32>
    %92 = vector.broadcast %39 : vector<8x1x128xf32> to vector<8x8x128xf32>
    %93 = arith.cmpf olt, %91, %92 : vector<8x8x128xf32>
    %94 = arith.extui %93 : vector<8x8x128xi1> to vector<8x8x128xi32>
    %95 = arith.sitofp %94 : vector<8x8x128xi32> to vector<8x8x128xf32>
    %96 = arith.addf %89, %95 : vector<8x8x128xf32>
    %97 = vector.extract_strided_slice %38 {offsets = [0, 64, 0], sizes = [8, 8, 1], strides = [1, 1, 1]} : vector<8x128x1xf32> to vector<8x8x1xf32>
    %98 = vector.broadcast %97 : vector<8x8x1xf32> to vector<8x8x128xf32>
    %99 = vector.broadcast %39 : vector<8x1x128xf32> to vector<8x8x128xf32>
    %100 = arith.cmpf olt, %98, %99 : vector<8x8x128xf32>
    %101 = arith.extui %100 : vector<8x8x128xi1> to vector<8x8x128xi32>
    %102 = arith.sitofp %101 : vector<8x8x128xi32> to vector<8x8x128xf32>
    %103 = arith.addf %96, %102 : vector<8x8x128xf32>
    %104 = vector.extract_strided_slice %38 {offsets = [0, 72, 0], sizes = [8, 8, 1], strides = [1, 1, 1]} : vector<8x128x1xf32> to vector<8x8x1xf32>
    %105 = vector.broadcast %104 : vector<8x8x1xf32> to vector<8x8x128xf32>
    %106 = vector.broadcast %39 : vector<8x1x128xf32> to vector<8x8x128xf32>
    %107 = arith.cmpf olt, %105, %106 : vector<8x8x128xf32>
    %108 = arith.extui %107 : vector<8x8x128xi1> to vector<8x8x128xi32>
    %109 = arith.sitofp %108 : vector<8x8x128xi32> to vector<8x8x128xf32>
    %110 = arith.addf %103, %109 : vector<8x8x128xf32>
    %111 = vector.extract_strided_slice %38 {offsets = [0, 80, 0], sizes = [8, 8, 1], strides = [1, 1, 1]} : vector<8x128x1xf32> to vector<8x8x1xf32>
    %112 = vector.broadcast %111 : vector<8x8x1xf32> to vector<8x8x128xf32>
    %113 = vector.broadcast %39 : vector<8x1x128xf32> to vector<8x8x128xf32>
    %114 = arith.cmpf olt, %112, %113 : vector<8x8x128xf32>
    %115 = arith.extui %114 : vector<8x8x128xi1> to vector<8x8x128xi32>
    %116 = arith.sitofp %115 : vector<8x8x128xi32> to vector<8x8x128xf32>
    %117 = arith.addf %110, %116 : vector<8x8x128xf32>
    %118 = vector.extract_strided_slice %38 {offsets = [0, 88, 0], sizes = [8, 8, 1], strides = [1, 1, 1]} : vector<8x128x1xf32> to vector<8x8x1xf32>
    %119 = vector.broadcast %118 : vector<8x8x1xf32> to vector<8x8x128xf32>
    %120 = vector.broadcast %39 : vector<8x1x128xf32> to vector<8x8x128xf32>
    %121 = arith.cmpf olt, %119, %120 : vector<8x8x128xf32>
    %122 = arith.extui %121 : vector<8x8x128xi1> to vector<8x8x128xi32>
    %123 = arith.sitofp %122 : vector<8x8x128xi32> to vector<8x8x128xf32>
    %124 = arith.addf %117, %123 : vector<8x8x128xf32>
    %125 = vector.extract_strided_slice %38 {offsets = [0, 96, 0], sizes = [8, 8, 1], strides = [1, 1, 1]} : vector<8x128x1xf32> to vector<8x8x1xf32>
    %126 = vector.broadcast %125 : vector<8x8x1xf32> to vector<8x8x128xf32>
    %127 = vector.broadcast %39 : vector<8x1x128xf32> to vector<8x8x128xf32>
    %128 = arith.cmpf olt, %126, %127 : vector<8x8x128xf32>
    %129 = arith.extui %128 : vector<8x8x128xi1> to vector<8x8x128xi32>
    %130 = arith.sitofp %129 : vector<8x8x128xi32> to vector<8x8x128xf32>
    %131 = arith.addf %124, %130 : vector<8x8x128xf32>
    %132 = vector.extract_strided_slice %38 {offsets = [0, 104, 0], sizes = [8, 8, 1], strides = [1, 1, 1]} : vector<8x128x1xf32> to vector<8x8x1xf32>
    %133 = vector.broadcast %132 : vector<8x8x1xf32> to vector<8x8x128xf32>
    %134 = vector.broadcast %39 : vector<8x1x128xf32> to vector<8x8x128xf32>
    %135 = arith.cmpf olt, %133, %134 : vector<8x8x128xf32>
    %136 = arith.extui %135 : vector<8x8x128xi1> to vector<8x8x128xi32>
    %137 = arith.sitofp %136 : vector<8x8x128xi32> to vector<8x8x128xf32>
    %138 = arith.addf %131, %137 : vector<8x8x128xf32>
    %139 = vector.extract_strided_slice %38 {offsets = [0, 112, 0], sizes = [8, 8, 1], strides = [1, 1, 1]} : vector<8x128x1xf32> to vector<8x8x1xf32>
    %140 = vector.broadcast %139 : vector<8x8x1xf32> to vector<8x8x128xf32>
    %141 = vector.broadcast %39 : vector<8x1x128xf32> to vector<8x8x128xf32>
    %142 = arith.cmpf olt, %140, %141 : vector<8x8x128xf32>
    %143 = arith.extui %142 : vector<8x8x128xi1> to vector<8x8x128xi32>
    %144 = arith.sitofp %143 : vector<8x8x128xi32> to vector<8x8x128xf32>
    %145 = arith.addf %138, %144 : vector<8x8x128xf32>
    %146 = vector.extract_strided_slice %38 {offsets = [0, 120, 0], sizes = [8, 8, 1], strides = [1, 1, 1]} : vector<8x128x1xf32> to vector<8x8x1xf32>
    %147 = vector.broadcast %146 : vector<8x8x1xf32> to vector<8x8x128xf32>
    %148 = vector.broadcast %39 : vector<8x1x128xf32> to vector<8x8x128xf32>
    %149 = arith.cmpf olt, %147, %148 : vector<8x8x128xf32>
    %150 = arith.extui %149 : vector<8x8x128xi1> to vector<8x8x128xi32>
    %151 = arith.sitofp %150 : vector<8x8x128xi32> to vector<8x8x128xf32>
    %152 = arith.addf %145, %151 : vector<8x8x128xf32>
    %cst_14 = arith.constant dense<0.000000e+00> : vector<8x128xf32>
    %153 = vector.multi_reduction <add>, %152, %cst_14 [1] : vector<8x8x128xf32> to vector<8x128xf32>
    %cst_15 = arith.constant 9.600000e+01 : f32
    %cst_16 = arith.constant 1.000000e+00 : f32
    %154 = arith.subf %cst_15, %cst_16 : f32
    %155 = vector.broadcast %154 : f32 to vector<8x1xf32>
    %156 = arith.mulf %33, %155 : vector<8x1xf32>
    %157 = math.floor %156 : vector<8x1xf32>
    %158 = arith.subf %156, %157 : vector<8x1xf32>
    %159 = math.ceil %156 : vector<8x1xf32>
    %cst_17 = arith.constant 9.600000e+01 : f32
    %cst_18 = arith.constant 1.000000e+00 : f32
    %160 = arith.subf %cst_17, %cst_18 : f32
    %161 = vector.broadcast %160 : f32 to vector<8x1xf32>
    %162 = arith.minimumf %159, %161 : vector<8x1xf32>
    %163 = vector.broadcast %157 : vector<8x1xf32> to vector<8x128xf32>
    %164 = arith.cmpf ole, %153, %163 : vector<8x128xf32>
    %cst_19 = arith.constant -1.000000e+30 : f32
    %165 = vector.broadcast %cst_19 : f32 to vector<8x128xf32>
    %166 = arith.select %164, %37, %165 : vector<8x128xi1>, vector<8x128xf32>
    %cst_20 = arith.constant dense<0xFF800000> : vector<8xf32>
    %167 = vector.multi_reduction <maximumf>, %166, %cst_20 [1] : vector<8x128xf32> to vector<8xf32>
    %168 = vector.shape_cast %167 : vector<8xf32> to vector<8x1xf32>
    %169 = vector.broadcast %162 : vector<8x1xf32> to vector<8x128xf32>
    %170 = arith.cmpf ole, %153, %169 : vector<8x128xf32>
    %cst_21 = arith.constant -1.000000e+30 : f32
    %171 = vector.broadcast %cst_21 : f32 to vector<8x128xf32>
    %172 = arith.select %170, %37, %171 : vector<8x128xi1>, vector<8x128xf32>
    %cst_22 = arith.constant dense<0xFF800000> : vector<8xf32>
    %173 = vector.multi_reduction <maximumf>, %172, %cst_22 [1] : vector<8x128xf32> to vector<8xf32>
    %174 = vector.shape_cast %173 : vector<8xf32> to vector<8x1xf32>
    %175 = arith.subf %174, %168 : vector<8x1xf32>
    %176 = arith.mulf %158, %175 : vector<8x1xf32>
    %177 = arith.addf %168, %176 : vector<8x1xf32>
    %cst_23 = arith.constant 0.000000e+00 : f32
    %178 = vector.broadcast %cst_23 : f32 to vector<8x1xf32>
    %179 = arith.subf %178, %177 : vector<8x1xf32>
    %cst_24 = arith.constant 9.99999993E-9 : f32
    %180 = vector.broadcast %cst_24 : f32 to vector<8x1xf32>
    %181 = arith.addf %179, %180 : vector<8x1xf32>
    %182 = vector.broadcast %181 : vector<8x1xf32> to vector<8x128xf32>
    %183 = arith.addf %10, %182 : vector<8x128xf32>
    %cst_25 = arith.constant 0.000000e+00 : f32
    %184 = vector.broadcast %cst_25 : f32 to vector<8x128xf32>
    %185 = arith.maximumf %183, %184 : vector<8x128xf32>
    %cst_26 = arith.constant 9.99999993E-9 : f32
    %186 = vector.broadcast %cst_26 : f32 to vector<8x128xf32>
    %187 = arith.addf %185, %186 : vector<8x128xf32>
    %188 = math.log %187 : vector<8x128xf32>
    %189 = arith.addf %10, %188 : vector<8x128xf32>
    %cst_27 = arith.constant -1.000000e+30 : f32
    %190 = vector.broadcast %cst_27 : f32 to vector<8x128xf32>
    %191 = arith.select %4, %189, %190 : vector<8x128xi1>, vector<8x128xf32>
    %cst_28 = arith.constant dense<0xFF800000> : vector<8xf32>
    %192 = vector.multi_reduction <maximumf>, %191, %cst_28 [1] : vector<8x128xf32> to vector<8xf32>
    %193 = vector.shape_cast %192 : vector<8xf32> to vector<8x1xf32>
    %194 = vector.broadcast %193 : vector<8x1xf32> to vector<8x128xf32>
    %195 = arith.subf %191, %194 : vector<8x128xf32>
    %196 = math.exp %195 : vector<8x128xf32>
    %cst_29 = arith.constant 0.000000e+00 : f32
    %197 = vector.broadcast %cst_29 : f32 to vector<8x128xf32>
    %198 = arith.select %4, %196, %197 : vector<8x128xi1>, vector<8x128xf32>
    %cst_30 = arith.constant dense<0.000000e+00> : vector<8xf32>
    %199 = vector.multi_reduction <add>, %198, %cst_30 [1] : vector<8x128xf32> to vector<8xf32>
    %200 = vector.shape_cast %199 : vector<8xf32> to vector<8x1xf32>
    %201 = vector.broadcast %200 : vector<8x1xf32> to vector<8x128xf32>
    %202 = arith.divf %198, %201 : vector<8x128xf32>
    %c0_31 = arith.constant 0 : index
    %c0_32 = arith.constant 0 : index
    %203 = vector.load %arg3[%c0_31, %c0_32] : memref<8x128xf32, #tpu.memory_space<vmem>>, vector<8x128xf32>
    tpu.vector_store %arg3[%c0_31, %c0_32], %202 {strides = array<i32>} : memref<8x128xf32, #tpu.memory_space<vmem>>, vector<8x128xf32>,
    return
  }
  func.func @transform_0(%arg0: i32) -> i32 {
    %c0_i32 = arith.constant 0 : i32
    %c0_i32_0 = arith.constant 0 : i32
    return %c0_i32 : i32
  }
  func.func @transform_1(%arg0: i32) -> (i32, i32) {
    %c0_i32 = arith.constant 0 : i32
    %c0_i32_0 = arith.constant 0 : i32
    return %arg0, %c0_i32 : i32, i32
  }
  func.func @transform_2(%arg0: i32) -> (i32, i32) {
    %c0_i32 = arith.constant 0 : i32
    %c0_i32_0 = arith.constant 0 : i32
    return %arg0, %c0_i32 : i32, i32
  }
}

</mosaic_0001>

<llo_original>
// kernel: tpu_custom_call.1
$region0: #{tpu_custom_call.1}
  #allocation0 [shape = 'u32[]', space=smem, size = 0x4, offset = 0x4, fixed_abs, tag = 'smem constant byte address 0x4 - core index']
  #allocation1 [shape = 'u32[144,128]{1,0:T(1,128)}', space=vmem, size = 0x12000, scoped, tag = 'internal scratch']
  #allocation2 [shape = 'f32[1]{0:T(128)S(6)}', space=smem, size = 0x200, scoped, tag = 'scoped memory for tpu_custom_call.1']
  %s0 = inlined_call_operand.<no memory space> [shape: f32[1], index: 0, kind: input, shape index: {}]
  %s1 = inlined_call_operand.hbm [shape: f32[8,128], index: 1, kind: input, shape index: {}]
  %s2 = inlined_call_operand.hbm [shape: f32[8,128], index: 2, kind: output, shape index: {}]
  %s3 = sld [smem:[#allocation0]]
  $region22: #{tpu_custom_call.1} parent=0
    _
  %s5 = ssub.s32 1, %s3
  %s6 = scalar_select 0, %s5, %s3
  %7 = sst [smem:[#allocation2]] %s0
  $region1: #{tpu_custom_call.1} parent=0
    #allocation3 [shape = 'u8[4096]{0}', space=vmem, size = 0x1000, scoped, tag = 'input window, operand 1, single buffered']
    #allocation4 [shape = 's32[1]{0}', space=sflag, size = 0x4, scoped, tag = 'scoped memory for tpu_custom_call.1']
    #allocation5 [shape = 's32[1]{0}', space=sflag, size = 0x4, scoped, tag = 'scoped memory for tpu_custom_call.1']
    #allocation6 [shape = 'u8[4096]{0}', space=vmem, size = 0x1000, scoped, tag = 'output window, operand 0, single buffered']
    %8 = vsyncpa [#allocation4], 0
    %9 = vsyncpa [#allocation5], 0
    // Predicated region
    $region2: #{tpu_custom_call.1} parent=1 // pred_check
      _
    $region3: #{tpu_custom_call.1} parent=1 // pred_check_branch
      %11 = sbr.rel (0) target = $region5
    $region4: #{tpu_custom_call.1} parent=1 // pred_region
      _
    $region5: #{tpu_custom_call.1} parent=1 // pred_fallthru
      _
    // Predicated region
    $region6: #{tpu_custom_call.1} parent=1 // pred_check
      _
    $region7: #{tpu_custom_call.1} parent=1 // pred_check_branch
      %13 = sbr.rel (0) target = $region9
    $region8: #{tpu_custom_call.1} parent=1 // pred_region
      %s15 = ssub.s32 128, 128
      %16 = vsyncadd [#allocation4], %s15
      %s18 = sshll.u32 [#allocation3], 4
      %s19 = int_to_ptr.vmem [resolvable:$true] %s18
      %21 = dma.hbm_to_vmem [thread:$0]  %s1, 128, %s19, [#allocation4]
    $region9: #{tpu_custom_call.1} parent=1 // pred_fallthru
      _
    // Predicated region
    $region10: #{tpu_custom_call.1} parent=1 // pred_check
      _
    $region11: #{tpu_custom_call.1} parent=1 // pred_check_branch
      %23 = sbr.rel (0) target = $region13
    $region12: #{tpu_custom_call.1} parent=1 // pred_region
      %24 = dma.done [#allocation4], 128
    $region13: #{tpu_custom_call.1} parent=1 // pred_fallthru
      _
    %v25 = vld [vmem:[#allocation3] sm:$0xff]
    %s26 = sld [smem:[#allocation2]]
    %v27 = vlaneseq
    %v28 = vand.u32 %v27, 127
    %vm29 = vcmp.lt.s32.totalorder %v28, 96
    %v30 = vsel %vm29, %v25, -1e+30
    %31 = vmax.xlane.f32.xlu0 %v30
    %v32 = vpop.xlane.xlu0 %31
    %v33 = vsub.f32 %v25, %v32
    %v34 = vsel %vm29, %v33, 0.0
    %v35 = vmul.f32 %v34, 1.442695
    %v36 = vpow.pop %v35
    %vm37 = vcmp.eq.f32.partialorder %v36, 0.0
    %vm38 = vmand %vm37, %vm29
    %v39 = vsel %vm38, 1, 0
    %v40 = vcvt.s32.f32 %v39
    %41 = vadd.xlane.f32.xlu0 %v40
    %v42 = vpop.xlane.xlu0 %41
    %v43 = vrcp.pop 96.0
    %v44 = vmul.f32 %v42, %v43
    %v45 = vsub.f32 1.0, %v44
    %v46 = vmax.f32 %v45, 1e-12
    %v47 = vstv %s26
    %v48 = vsub.f32 %v47, %v44
    %v49 = vrcp.pop %v46
    %v50 = vmul.f32 %v48, %v49
    %v51 = vmax.f32 %v50, 0.0
    %v52 = vmin.f32 %v51, 1.0
    %v53 = vsel %vm38, 0.0, %v33
    %v54 = vsel %vm29, %v53, 1e+30
    %v55 = vlaneseq
    %v56 = vshrl.u32 %v55, 7
    %v57 = vsub.s32 0, %v56
    %v58 = vrot.slane %v54, %v57
    %60 = vbcast.lane.b32.xlu0 %v58, 256
    %v61 = vpop.permute.xlu0 %60
    %s63 = sor.u32 256, 8
    %64 = vbcast.lane.b32.xlu0 %v58, %s63
    %v65 = vpop.permute.xlu0 %64
    %s67 = sor.u32 256, 16
    %68 = vbcast.lane.b32.xlu0 %v58, %s67
    %v69 = vpop.permute.xlu0 %68
    %s71 = sor.u32 256, 24
    %72 = vbcast.lane.b32.xlu0 %v58, %s71
    %v73 = vpop.permute.xlu0 %72
    %s75 = sor.u32 256, 32
    %76 = vbcast.lane.b32.xlu0 %v58, %s75
    %v77 = vpop.permute.xlu0 %76
    %s79 = sor.u32 256, 40
    %80 = vbcast.lane.b32.xlu0 %v58, %s79
    %v81 = vpop.permute.xlu0 %80
    %s83 = sor.u32 256, 48
    %84 = vbcast.lane.b32.xlu0 %v58, %s83
    %v85 = vpop.permute.xlu0 %84
    %s87 = sor.u32 256, 56
    %88 = vbcast.lane.b32.xlu0 %v58, %s87
    %v89 = vpop.permute.xlu0 %88
    %s91 = sor.u32 256, 64
    %92 = vbcast.lane.b32.xlu0 %v58, %s91
    %v93 = vpop.permute.xlu0 %92
    %s95 = sor.u32 256, 72
    %96 = vbcast.lane.b32.xlu0 %v58, %s95
    %v97 = vpop.permute.xlu0 %96
    %s99 = sor.u32 256, 80
    %100 = vbcast.lane.b32.xlu0 %v58, %s99
    %v101 = vpop.permute.xlu0 %100
    %s103 = sor.u32 256, 88
    %104 = vbcast.lane.b32.xlu0 %v58, %s103
    %v105 = vpop.permute.xlu0 %104
    %s107 = sor.u32 256, 96
    %108 = vbcast.lane.b32.xlu0 %v58, %s107
    %v109 = vpop.permute.xlu0 %108
    %s111 = sor.u32 256, 104
    %112 = vbcast.lane.b32.xlu0 %v58, %s111
    %v113 = vpop.permute.xlu0 %112
    %s115 = sor.u32 256, 112
    %116 = vbcast.lane.b32.xlu0 %v58, %s115
    %v117 = vpop.permute.xlu0 %116
    %s119 = sor.u32 256, 120
    %120 = vbcast.lane.b32.xlu0 %v58, %s119
    %v121 = vpop.permute.xlu0 %120
    %v122 = vlaneseq
    %v123 = vshrl.u32 %v122, 7
    %v124 = vsub.s32 1, %v123
    %v125 = vrot.slane %v54, %v124
    %127 = vbcast.lane.b32.xlu0 %v125, 256
    %v128 = vpop.permute.xlu0 %127
    %s130 = sor.u32 256, 8
    %131 = vbcast.lane.b32.xlu0 %v125, %s130
    %v132 = vpop.permute.xlu0 %131
    %s134 = sor.u32 256, 16
    %135 = vbcast.lane.b32.xlu0 %v125, %s134
    %v136 = vpop.permute.xlu0 %135
    %s138 = sor.u32 256, 24
    %139 = vbcast.lane.b32.xlu0 %v125, %s138
    %v140 = vpop.permute.xlu0 %139
    %s142 = sor.u32 256, 32
    %143 = vbcast.lane.b32.xlu0 %v125, %s142
    %v144 = vpop.permute.xlu0 %143
    %s146 = sor.u32 256, 40
    %147 = vbcast.lane.b32.xlu0 %v125, %s146
    %v148 = vpop.permute.xlu0 %147
    %s150 = sor.u32 256, 48
    %151 = vbcast.lane.b32.xlu0 %v125, %s150
    %v152 = vpop.permute.xlu0 %151
    %s154 = sor.u32 256, 56
    %155 = vbcast.lane.b32.xlu0 %v125, %s154
    %v156 = vpop.permute.xlu0 %155
    %s158 = sor.u32 256, 64
    %159 = vbcast.lane.b32.xlu0 %v125, %s158
    %v160 = vpop.permute.xlu0 %159
    %s162 = sor.u32 256, 72
    %163 = vbcast.lane.b32.xlu0 %v125, %s162
    %v164 = vpop.permute.xlu0 %163
    %s166 = sor.u32 256, 80
    %167 = vbcast.lane.b32.xlu0 %v125, %s166
    %v168 = vpop.permute.xlu0 %167
    %s170 = sor.u32 256, 88
    %171 = vbcast.lane.b32.xlu0 %v125, %s170
    %v172 = vpop.permute.xlu0 %171
    %s174 = sor.u32 256, 96
    %175 = vbcast.lane.b32.xlu0 %v125, %s174
    %v176 = vpop.permute.xlu0 %175
    %s178 = sor.u32 256, 104
    %179 = vbcast.lane.b32.xlu0 %v125, %s178
    %v180 = vpop.permute.xlu0 %179
    %s182 = sor.u32 256, 112
    %183 = vbcast.lane.b32.xlu0 %v125, %s182
    %v184 = vpop.permute.xlu0 %183
    %s186 = sor.u32 256, 120
    %187 = vbcast.lane.b32.xlu0 %v125, %s186
    %v188 = vpop.permute.xlu0 %187
    %v189 = vlaneseq
    %v190 = vshrl.u32 %v189, 7
    %v191 = vsub.s32 2, %v190
    %v192 = vrot.slane %v54, %v191
    %194 = vbcast.lane.b32.xlu0 %v192, 256
    %v195 = vpop.permute.xlu0 %194
    %s197 = sor.u32 256, 8
    %198 = vbcast.lane.b32.xlu0 %v192, %s197
    %v199 = vpop.permute.xlu0 %198
    %s201 = sor.u32 256, 16
    %202 = vbcast.lane.b32.xlu0 %v192, %s201
    %v203 = vpop.permute.xlu0 %202
    %s205 = sor.u32 256, 24
    %206 = vbcast.lane.b32.xlu0 %v192, %s205
    %v207 = vpop.permute.xlu0 %206
    %s209 = sor.u32 256, 32
    %210 = vbcast.lane.b32.xlu0 %v192, %s209
    %v211 = vpop.permute.xlu0 %210
    %s213 = sor.u32 256, 40
    %214 = vbcast.lane.b32.xlu0 %v192, %s213
    %v215 = vpop.permute.xlu0 %214
    %s217 = sor.u32 256, 48
    %218 = vbcast.lane.b32.xlu0 %v192, %s217
    %v219 = vpop.permute.xlu0 %218
    %s221 = sor.u32 256, 56
    %222 = vbcast.lane.b32.xlu0 %v192, %s221
    %v223 = vpop.permute.xlu0 %222
    %s225 = sor.u32 256, 64
    %226 = vbcast.lane.b32.xlu0 %v192, %s225
    %v227 = vpop.permute.xlu0 %226
    %s229 = sor.u32 256, 72
    %230 = vbcast.lane.b32.xlu0 %v192, %s229
    %v231 = vpop.permute.xlu0 %230
    %s233 = sor.u32 256, 80
    %234 = vbcast.lane.b32.xlu0 %v192, %s233
    %v235 = vpop.permute.xlu0 %234
    %s237 = sor.u32 256, 88
    %238 = vbcast.lane.b32.xlu0 %v192, %s237
    %v239 = vpop.permute.xlu0 %238
    %s241 = sor.u32 256, 96
    %242 = vbcast.lane.b32.xlu0 %v192, %s241
    %v243 = vpop.permute.xlu0 %242
    %s245 = sor.u32 256, 104
    %246 = vbcast.lane.b32.xlu0 %v192, %s245
    %v247 = vpop.permute.xlu0 %246
    %s249 = sor.u32 256, 112
    %250 = vbcast.lane.b32.xlu0 %v192, %s249
    %v251 = vpop.permute.xlu0 %250
    %s253 = sor.u32 256, 120
    %254 = vbcast.lane.b32.xlu0 %v192, %s253
    %v255 = vpop.permute.xlu0 %254
    %v256 = vlaneseq
    %v257 = vshrl.u32 %v256, 7
    %v258 = vsub.s32 3, %v257
    %v259 = vrot.slane %v54, %v258
    %261 = vbcast.lane.b32.xlu0 %v259, 256
    %v262 = vpop.permute.xlu0 %261
    %s264 = sor.u32 256, 8
    %265 = vbcast.lane.b32.xlu0 %v259, %s264
    %v266 = vpop.permute.xlu0 %265
    %s268 = sor.u32 256, 16
    %269 = vbcast.lane.b32.xlu0 %v259, %s268
    %v270 = vpop.permute.xlu0 %269
    %s272 = sor.u32 256, 24
    %273 = vbcast.lane.b32.xlu0 %v259, %s272
    %v274 = vpop.permute.xlu0 %273
    %s276 = sor.u32 256, 32
    %277 = vbcast.lane.b32.xlu0 %v259, %s276
    %v278 = vpop.permute.xlu0 %277
    %s280 = sor.u32 256, 40
    %281 = vbcast.lane.b32.xlu0 %v259, %s280
    %v282 = vpop.permute.xlu0 %281
    %s284 = sor.u32 256, 48
    %285 = vbcast.lane.b32.xlu0 %v259, %s284
    %v286 = vpop.permute.xlu0 %285
    %s288 = sor.u32 256, 56
    %289 = vbcast.lane.b32.xlu0 %v259, %s288
    %v290 = vpop.permute.xlu0 %289
    %s292 = sor.u32 256, 64
    %293 = vbcast.lane.b32.xlu0 %v259, %s292
    %v294 = vpop.permute.xlu0 %293
    %s296 = sor.u32 256, 72
    %297 = vbcast.lane.b32.xlu0 %v259, %s296
    %v298 = vpop.permute.xlu0 %297
    %s300 = sor.u32 256, 80
    %301 = vbcast.lane.b32.xlu0 %v259, %s300
    %v302 = vpop.permute.xlu0 %301
    %s304 = sor.u32 256, 88
    %305 = vbcast.lane.b32.xlu0 %v259, %s304
    %v306 = vpop.permute.xlu0 %305
    %s308 = sor.u32 256, 96
    %309 = vbcast.lane.b32.xlu0 %v259, %s308
    %v310 = vpop.permute.xlu0 %309
    %s312 = sor.u32 256, 104
    %313 = vbcast.lane.b32.xlu0 %v259, %s312
    %v314 = vpop.permute.xlu0 %313
    %s316 = sor.u32 256, 112
    %317 = vbcast.lane.b32.xlu0 %v259, %s316
    %v318 = vpop.permute.xlu0 %317
    %s320 = sor.u32 256, 120
    %321 = vbcast.lane.b32.xlu0 %v259, %s320
    %v322 = vpop.permute.xlu0 %321
    %v323 = vlaneseq
    %v324 = vshrl.u32 %v323, 7
    %v325 = vsub.s32 4, %v324
    %v326 = vrot.slane %v54, %v325
    %328 = vbcast.lane.b32.xlu0 %v326, 256
    %v329 = vpop.permute.xlu0 %328
    %s331 = sor.u32 256, 8
    %332 = vbcast.lane.b32.xlu0 %v326, %s331
    %v333 = vpop.permute.xlu0 %332
    %s335 = sor.u32 256, 16
    %336 = vbcast.lane.b32.xlu0 %v326, %s335
    %v337 = vpop.permute.xlu0 %336
    %s339 = sor.u32 256, 24
    %340 = vbcast.lane.b32.xlu0 %v326, %s339
    %v341 = vpop.permute.xlu0 %340
    %s343 = sor.u32 256, 32
    %344 = vbcast.lane.b32.xlu0 %v326, %s343
    %v345 = vpop.permute.xlu0 %344
    %s347 = sor.u32 256, 40
    %348 = vbcast.lane.b32.xlu0 %v326, %s347
    %v349 = vpop.permute.xlu0 %348
    %s351 = sor.u32 256, 48
    %352 = vbcast.lane.b32.xlu0 %v326, %s351
    %v353 = vpop.permute.xlu0 %352
    %s355 = sor.u32 256, 56
    %356 = vbcast.lane.b32.xlu0 %v326, %s355
    %v357 = vpop.permute.xlu0 %356
    %s359 = sor.u32 256, 64
    %360 = vbcast.lane.b32.xlu0 %v326, %s359
    %v361 = vpop.permute.xlu0 %360
    %s363 = sor.u32 256, 72
    %364 = vbcast.lane.b32.xlu0 %v326, %s363
    %v365 = vpop.permute.xlu0 %364
    %s367 = sor.u32 256, 80
    %368 = vbcast.lane.b32.xlu0 %v326, %s367
    %v369 = vpop.permute.xlu0 %368
    %s371 = sor.u32 256, 88
    %372 = vbcast.lane.b32.xlu0 %v326, %s371
    %v373 = vpop.permute.xlu0 %372
    %s375 = sor.u32 256, 96
    %376 = vbcast.lane.b32.xlu0 %v326, %s375
    %v377 = vpop.permute.xlu0 %376
    %s379 = sor.u32 256, 104
    %380 = vbcast.lane.b32.xlu0 %v326, %s379
    %v381 = vpop.permute.xlu0 %380
    %s383 = sor.u32 256, 112
    %384 = vbcast.lane.b32.xlu0 %v326, %s383
    %v385 = vpop.permute.xlu0 %384
    %s387 = sor.u32 256, 120
    %388 = vbcast.lane.b32.xlu0 %v326, %s387
    %v389 = vpop.permute.xlu0 %388
    %v390 = vlaneseq
    %v391 = vshrl.u32 %v390, 7
    %v392 = vsub.s32 5, %v391
    %v393 = vrot.slane %v54, %v392
    %395 = vbcast.lane.b32.xlu0 %v393, 256
    %v396 = vpop.permute.xlu0 %395
    %s398 = sor.u32 256, 8
    %399 = vbcast.lane.b32.xlu0 %v393, %s398
    %v400 = vpop.permute.xlu0 %399
    %s402 = sor.u32 256, 16
    %403 = vbcast.lane.b32.xlu0 %v393, %s402
    %v404 = vpop.permute.xlu0 %403
    %s406 = sor.u32 256, 24
    %407 = vbcast.lane.b32.xlu0 %v393, %s406
    %v408 = vpop.permute.xlu0 %407
    %s410 = sor.u32 256, 32
    %411 = vbcast.lane.b32.xlu0 %v393, %s410
    %v412 = vpop.permute.xlu0 %411
    %s414 = sor.u32 256, 40
    %415 = vbcast.lane.b32.xlu0 %v393, %s414
    %v416 = vpop.permute.xlu0 %415
    %s418 = sor.u32 256, 48
    %419 = vbcast.lane.b32.xlu0 %v393, %s418
    %v420 = vpop.permute.xlu0 %419
    %s422 = sor.u32 256, 56
    %423 = vbcast.lane.b32.xlu0 %v393, %s422
    %v424 = vpop.permute.xlu0 %423
    %s426 = sor.u32 256, 64
    %427 = vbcast.lane.b32.xlu0 %v393, %s426
    %v428 = vpop.permute.xlu0 %427
    %s430 = sor.u32 256, 72
    %431 = vbcast.lane.b32.xlu0 %v393, %s430
    %v432 = vpop.permute.xlu0 %431
    %s434 = sor.u32 256, 80
    %435 = vbcast.lane.b32.xlu0 %v393, %s434
    %v436 = vpop.permute.xlu0 %435
    %s438 = sor.u32 256, 88
    %439 = vbcast.lane.b32.xlu0 %v393, %s438
    %v440 = vpop.permute.xlu0 %439
    %s442 = sor.u32 256, 96
    %443 = vbcast.lane.b32.xlu0 %v393, %s442
    %v444 = vpop.permute.xlu0 %443
    %s446 = sor.u32 256, 104
    %447 = vbcast.lane.b32.xlu0 %v393, %s446
    %v448 = vpop.permute.xlu0 %447
    %s450 = sor.u32 256, 112
    %451 = vbcast.lane.b32.xlu0 %v393, %s450
    %v452 = vpop.permute.xlu0 %451
    %s454 = sor.u32 256, 120
    %455 = vbcast.lane.b32.xlu0 %v393, %s454
    %v456 = vpop.permute.xlu0 %455
    %v457 = vlaneseq
    %v458 = vshrl.u32 %v457, 7
    %v459 = vsub.s32 6, %v458
    %v460 = vrot.slane %v54, %v459
    %462 = vbcast.lane.b32.xlu0 %v460, 256
    %v463 = vpop.permute.xlu0 %462
    %s465 = sor.u32 256, 8
    %466 = vbcast.lane.b32.xlu0 %v460, %s465
    %v467 = vpop.permute.xlu0 %466
    %s469 = sor.u32 256, 16
    %470 = vbcast.lane.b32.xlu0 %v460, %s469
    %v471 = vpop.permute.xlu0 %470
    %s473 = sor.u32 256, 24
    %474 = vbcast.lane.b32.xlu0 %v460, %s473
    %v475 = vpop.permute.xlu0 %474
    %s477 = sor.u32 256, 32
    %478 = vbcast.lane.b32.xlu0 %v460, %s477
    %v479 = vpop.permute.xlu0 %478
    %s481 = sor.u32 256, 40
    %482 = vbcast.lane.b32.xlu0 %v460, %s481
    %v483 = vpop.permute.xlu0 %482
    %s485 = sor.u32 256, 48
    %486 = vbcast.lane.b32.xlu0 %v460, %s485
    %v487 = vpop.permute.xlu0 %486
    %s489 = sor.u32 256, 56
    %490 = vbcast.lane.b32.xlu0 %v460, %s489
    %v491 = vpop.permute.xlu0 %490
    %s493 = sor.u32 256, 64
    %494 = vbcast.lane.b32.xlu0 %v460, %s493
    %v495 = vpop.permute.xlu0 %494
    %s497 = sor.u32 256, 72
    %498 = vbcast.lane.b32.xlu0 %v460, %s497
    %v499 = vpop.permute.xlu0 %498
    %s501 = sor.u32 256, 80
    %502 = vbcast.lane.b32.xlu0 %v460, %s501
    %v503 = vpop.permute.xlu0 %502
    %s505 = sor.u32 256, 88
    %506 = vbcast.lane.b32.xlu0 %v460, %s505
    %v507 = vpop.permute.xlu0 %506
    %s509 = sor.u32 256, 96
    %510 = vbcast.lane.b32.xlu0 %v460, %s509
    %v511 = vpop.permute.xlu0 %510
    %s513 = sor.u32 256, 104
    %514 = vbcast.lane.b32.xlu0 %v460, %s513
    %v515 = vpop.permute.xlu0 %514
    %s517 = sor.u32 256, 112
    %518 = vbcast.lane.b32.xlu0 %v460, %s517
    %v519 = vpop.permute.xlu0 %518
    %s521 = sor.u32 256, 120
    %522 = vbcast.lane.b32.xlu0 %v460, %s521
    %v523 = vpop.permute.xlu0 %522
    %v524 = vlaneseq
    %v525 = vshrl.u32 %v524, 7
    %v526 = vsub.s32 7, %v525
    %v527 = vrot.slane %v54, %v526
    %529 = vbcast.lane.b32.xlu0 %v527, 256
    %v530 = vpop.permute.xlu0 %529
    %s532 = sor.u32 256, 8
    %533 = vbcast.lane.b32.xlu0 %v527, %s532
    %v534 = vpop.permute.xlu0 %533
    %s536 = sor.u32 256, 16
    %537 = vbcast.lane.b32.xlu0 %v527, %s536
    %v538 = vpop.permute.xlu0 %537
    %s540 = sor.u32 256, 24
    %541 = vbcast.lane.b32.xlu0 %v527, %s540
    %v542 = vpop.permute.xlu0 %541
    %s544 = sor.u32 256, 32
    %545 = vbcast.lane.b32.xlu0 %v527, %s544
    %v546 = vpop.permute.xlu0 %545
    %s548 = sor.u32 256, 40
    %549 = vbcast.lane.b32.xlu0 %v527, %s548
    %v550 = vpop.permute.xlu0 %549
    %s552 = sor.u32 256, 48
    %553 = vbcast.lane.b32.xlu0 %v527, %s552
    %v554 = vpop.permute.xlu0 %553
    %s556 = sor.u32 256, 56
    %557 = vbcast.lane.b32.xlu0 %v527, %s556
    %v558 = vpop.permute.xlu0 %557
    %s560 = sor.u32 256, 64
    %561 = vbcast.lane.b32.xlu0 %v527, %s560
    %v562 = vpop.permute.xlu0 %561
    %s564 = sor.u32 256, 72
    %565 = vbcast.lane.b32.xlu0 %v527, %s564
    %v566 = vpop.permute.xlu0 %565
    %s568 = sor.u32 256, 80
    %569 = vbcast.lane.b32.xlu0 %v527, %s568
    %v570 = vpop.permute.xlu0 %569
    %s572 = sor.u32 256, 88
    %573 = vbcast.lane.b32.xlu0 %v527, %s572
    %v574 = vpop.permute.xlu0 %573
    %s576 = sor.u32 256, 96
    %577 = vbcast.lane.b32.xlu0 %v527, %s576
    %v578 = vpop.permute.xlu0 %577
    %s580 = sor.u32 256, 104
    %581 = vbcast.lane.b32.xlu0 %v527, %s580
    %v582 = vpop.permute.xlu0 %581
    %s584 = sor.u32 256, 112
    %585 = vbcast.lane.b32.xlu0 %v527, %s584
    %v586 = vpop.permute.xlu0 %585
    %s588 = sor.u32 256, 120
    %589 = vbcast.lane.b32.xlu0 %v527, %s588
    %v590 = vpop.permute.xlu0 %589
    %v592 = vcombine.high %v54, %v54
    %v594 = vunpack.c.l.s4 1966171168
    %v595 = vunpack.c.0.s8 %v594
    %v596 = vlaneseq
    %v597 = vshrl.u32 %v596, 7
    %v598 = vsub.s32 %v595, %v597
    %v599 = vrot.slane %v54, %v598
    %v601 = vunpack.c.l.s4 1966171168
    %v602 = vunpack.c.0.s8 %v601
    %v603 = vlaneseq
    %v604 = vshrl.u32 %v603, 7
    %v605 = vsub.s32 %v602, %v604
    %v606 = vrot.slane %v592, %v605
    %v607 = vcombine.high %v599, %v599
    %v608 = vcombine.high %v606, %v606
    %v610 = vunpack.c.l.s4 1966171168
    %v611 = vunpack.c.0.s8 %v610
    %v612 = vlaneseq
    %v613 = vshrl.u32 %v612, 7
    %v614 = vsub.s32 %v611, %v613
    %v615 = vrot.slane %v599, %v614
    %v617 = vunpack.c.l.s4 1966171168
    %v618 = vunpack.c.0.s8 %v617
    %v619 = vlaneseq
    %v620 = vshrl.u32 %v619, 7
    %v621 = vsub.s32 %v618, %v620
    %v622 = vrot.slane %v606, %v621
    %v624 = vunpack.c.l.s4 1966171168
    %v625 = vunpack.c.0.s8 %v624
    %v626 = vlaneseq
    %v627 = vshrl.u32 %v626, 7
    %v628 = vsub.s32 %v625, %v627
    %v629 = vrot.slane %v607, %v628
    %v631 = vunpack.c.l.s4 1966171168
    %v632 = vunpack.c.0.s8 %v631
    %v633 = vlaneseq
    %v634 = vshrl.u32 %v633, 7
    %v635 = vsub.s32 %v632, %v634
    %v636 = vrot.slane %v608, %v635
    %v637 = vcombine.high %v615, %v615
    %v638 = vcombine.high %v622, %v622
    %v639 = vcombine.high %v629, %v629
    %v640 = vcombine.high %v636, %v636
    %v641 = vlaneseq
    %v642 = vshrl.u32 %v641, 7
    %v643 = vsub.s32 0, %v642
    %v644 = vrot.slane %v615, %v643
    %v645 = vlaneseq
    %v646 = vshrl.u32 %v645, 7
    %v647 = vsub.s32 0, %v646
    %v648 = vrot.slane %v629, %v647
    %v649 = vlaneseq
    %v650 = vshrl.u32 %v649, 7
    %v651 = vsub.s32 0, %v650
    %v652 = vrot.slane %v637, %v651
    %v653 = vlaneseq
    %v654 = vshrl.u32 %v653, 7
    %v655 = vsub.s32 0, %v654
    %v656 = vrot.slane %v639, %v655
    %v657 = vlaneseq
    %v658 = vshrl.u32 %v657, 7
    %v659 = vsub.s32 0, %v658
    %v660 = vrot.slane %v622, %v659
    %v661 = vlaneseq
    %v662 = vshrl.u32 %v661, 7
    %v663 = vsub.s32 0, %v662
    %v664 = vrot.slane %v636, %v663
    %v665 = vlaneseq
    %v666 = vshrl.u32 %v665, 7
    %v667 = vsub.s32 0, %v666
    %v668 = vrot.slane %v638, %v667
    %v669 = vlaneseq
    %v670 = vshrl.u32 %v669, 7
    %v671 = vsub.s32 0, %v670
    %v672 = vrot.slane %v640, %v671
    %vm681 = vcmp.lt.f32.partialorder %v61, %v644
    %vm682 = vcmp.lt.f32.partialorder %v128, %v648
    %vm683 = vcmp.lt.f32.partialorder %v195, %v652
    %vm684 = vcmp.lt.f32.partialorder %v262, %v656
    %vm685 = vcmp.lt.f32.partialorder %v329, %v660
    %vm686 = vcmp.lt.f32.partialorder %v396, %v664
    %vm687 = vcmp.lt.f32.partialorder %v463, %v668
    %vm688 = vcmp.lt.f32.partialorder %v530, %v672
    %v689 = vsel %vm681, 1, 0
    %v690 = vsel %vm682, 1, 0
    %v691 = vsel %vm683, 1, 0
    %v692 = vsel %vm684, 1, 0
    %v693 = vsel %vm685, 1, 0
    %v694 = vsel %vm686, 1, 0
    %v695 = vsel %vm687, 1, 0
    %v696 = vsel %vm688, 1, 0
    %v697 = vcvt.s32.f32 %v689
    %v698 = vcvt.s32.f32 %v690
    %v699 = vcvt.s32.f32 %v691
    %v700 = vcvt.s32.f32 %v692
    %v701 = vcvt.s32.f32 %v693
    %v702 = vcvt.s32.f32 %v694
    %v703 = vcvt.s32.f32 %v695
    %v704 = vcvt.s32.f32 %v696
    %v705 = vadd.f32 %v697, 0.0
    %v706 = vadd.f32 %v698, 0.0
    %v707 = vadd.f32 %v699, 0.0
    %v708 = vadd.f32 %v700, 0.0
    %v709 = vadd.f32 %v701, 0.0
    %v710 = vadd.f32 %v702, 0.0
    %v711 = vadd.f32 %v703, 0.0
    %v712 = vadd.f32 %v704, 0.0
    %vm713 = vcmp.lt.f32.partialorder %v65, %v644
    %vm714 = vcmp.lt.f32.partialorder %v132, %v648
    %vm715 = vcmp.lt.f32.partialorder %v199, %v652
    %vm716 = vcmp.lt.f32.partialorder %v266, %v656
    %vm717 = vcmp.lt.f32.partialorder %v333, %v660
    %vm718 = vcmp.lt.f32.partialorder %v400, %v664
    %vm719 = vcmp.lt.f32.partialorder %v467, %v668
    %vm720 = vcmp.lt.f32.partialorder %v534, %v672
    %v721 = vsel %vm713, 1, 0
    %v722 = vsel %vm714, 1, 0
    %v723 = vsel %vm715, 1, 0
    %v724 = vsel %vm716, 1, 0
    %v725 = vsel %vm717, 1, 0
    %v726 = vsel %vm718, 1, 0
    %v727 = vsel %vm719, 1, 0
    %v728 = vsel %vm720, 1, 0
    %v729 = vcvt.s32.f32 %v721
    %v730 = vcvt.s32.f32 %v722
    %v731 = vcvt.s32.f32 %v723
    %v732 = vcvt.s32.f32 %v724
    %v733 = vcvt.s32.f32 %v725
    %v734 = vcvt.s32.f32 %v726
    %v735 = vcvt.s32.f32 %v727
    %v736 = vcvt.s32.f32 %v728
    %v737 = vadd.f32 %v705, %v729
    %v738 = vadd.f32 %v706, %v730
    %v739 = vadd.f32 %v707, %v731
    %v740 = vadd.f32 %v708, %v732
    %v741 = vadd.f32 %v709, %v733
    %v742 = vadd.f32 %v710, %v734
    %v743 = vadd.f32 %v711, %v735
    %v744 = vadd.f32 %v712, %v736
    %vm745 = vcmp.lt.f32.partialorder %v69, %v644
    %vm746 = vcmp.lt.f32.partialorder %v136, %v648
    %vm747 = vcmp.lt.f32.partialorder %v203, %v652
    %vm748 = vcmp.lt.f32.partialorder %v270, %v656
    %vm749 = vcmp.lt.f32.partialorder %v337, %v660
    %vm750 = vcmp.lt.f32.partialorder %v404, %v664
    %vm751 = vcmp.lt.f32.partialorder %v471, %v668
    %vm752 = vcmp.lt.f32.partialorder %v538, %v672
    %v753 = vsel %vm745, 1, 0
    %v754 = vsel %vm746, 1, 0
    %v755 = vsel %vm747, 1, 0
    %v756 = vsel %vm748, 1, 0
    %v757 = vsel %vm749, 1, 0
    %v758 = vsel %vm750, 1, 0
    %v759 = vsel %vm751, 1, 0
    %v760 = vsel %vm752, 1, 0
    %v761 = vcvt.s32.f32 %v753
    %v762 = vcvt.s32.f32 %v754
    %v763 = vcvt.s32.f32 %v755
    %v764 = vcvt.s32.f32 %v756
    %v765 = vcvt.s32.f32 %v757
    %v766 = vcvt.s32.f32 %v758
    %v767 = vcvt.s32.f32 %v759
    %v768 = vcvt.s32.f32 %v760
    %v769 = vadd.f32 %v737, %v761
    %v770 = vadd.f32 %v738, %v762
    %v771 = vadd.f32 %v739, %v763
    %v772 = vadd.f32 %v740, %v764
    %v773 = vadd.f32 %v741, %v765
    %v774 = vadd.f32 %v742, %v766
    %v775 = vadd.f32 %v743, %v767
    %v776 = vadd.f32 %v744, %v768
    %vm777 = vcmp.lt.f32.partialorder %v73, %v644
    %vm778 = vcmp.lt.f32.partialorder %v140, %v648
    %vm779 = vcmp.lt.f32.partialorder %v207, %v652
    %vm780 = vcmp.lt.f32.partialorder %v274, %v656
    %vm781 = vcmp.lt.f32.partialorder %v341, %v660
    %vm782 = vcmp.lt.f32.partialorder %v408, %v664
    %vm783 = vcmp.lt.f32.partialorder %v475, %v668
    %vm784 = vcmp.lt.f32.partialorder %v542, %v672
    %v785 = vsel %vm777, 1, 0
    %v786 = vsel %vm778, 1, 0
    %v787 = vsel %vm779, 1, 0
    %v788 = vsel %vm780, 1, 0
    %v789 = vsel %vm781, 1, 0
    %v790 = vsel %vm782, 1, 0
    %v791 = vsel %vm783, 1, 0
    %v792 = vsel %vm784, 1, 0
    %v793 = vcvt.s32.f32 %v785
    %v794 = vcvt.s32.f32 %v786
    %v795 = vcvt.s32.f32 %v787
    %v796 = vcvt.s32.f32 %v788
    %v797 = vcvt.s32.f32 %v789
    %v798 = vcvt.s32.f32 %v790
    %v799 = vcvt.s32.f32 %v791
    %v800 = vcvt.s32.f32 %v792
    %v801 = vadd.f32 %v769, %v793
    %v802 = vadd.f32 %v770, %v794
    %v803 = vadd.f32 %v771, %v795
    %v804 = vadd.f32 %v772, %v796
    %v805 = vadd.f32 %v773, %v797
    %v806 = vadd.f32 %v774, %v798
    %v807 = vadd.f32 %v775, %v799
    %v808 = vadd.f32 %v776, %v800
    %vm809 = vcmp.lt.f32.partialorder %v77, %v644
    %vm810 = vcmp.lt.f32.partialorder %v144, %v648
    %vm811 = vcmp.lt.f32.partialorder %v211, %v652
    %vm812 = vcmp.lt.f32.partialorder %v278, %v656
    %vm813 = vcmp.lt.f32.partialorder %v345, %v660
    %vm814 = vcmp.lt.f32.partialorder %v412, %v664
    %vm815 = vcmp.lt.f32.partialorder %v479, %v668
    %vm816 = vcmp.lt.f32.partialorder %v546, %v672
    %v817 = vsel %vm809, 1, 0
    %v818 = vsel %vm810, 1, 0
    %v819 = vsel %vm811, 1, 0
    %v820 = vsel %vm812, 1, 0
    %v821 = vsel %vm813, 1, 0
    %v822 = vsel %vm814, 1, 0
    %v823 = vsel %vm815, 1, 0
    %v824 = vsel %vm816, 1, 0
    %v825 = vcvt.s32.f32 %v817
    %v826 = vcvt.s32.f32 %v818
    %v827 = vcvt.s32.f32 %v819
    %v828 = vcvt.s32.f32 %v820
    %v829 = vcvt.s32.f32 %v821
    %v830 = vcvt.s32.f32 %v822
    %v831 = vcvt.s32.f32 %v823
    %v832 = vcvt.s32.f32 %v824
    %v833 = vadd.f32 %v801, %v825
    %v834 = vadd.f32 %v802, %v826
    %v835 = vadd.f32 %v803, %v827
    %v836 = vadd.f32 %v804, %v828
    %v837 = vadd.f32 %v805, %v829
    %v838 = vadd.f32 %v806, %v830
    %v839 = vadd.f32 %v807, %v831
    %v840 = vadd.f32 %v808, %v832
    %vm841 = vcmp.lt.f32.partialorder %v81, %v644
    %vm842 = vcmp.lt.f32.partialorder %v148, %v648
    %vm843 = vcmp.lt.f32.partialorder %v215, %v652
    %vm844 = vcmp.lt.f32.partialorder %v282, %v656
    %vm845 = vcmp.lt.f32.partialorder %v349, %v660
    %vm846 = vcmp.lt.f32.partialorder %v416, %v664
    %vm847 = vcmp.lt.f32.partialorder %v483, %v668
    %vm848 = vcmp.lt.f32.partialorder %v550, %v672
    %v849 = vsel %vm841, 1, 0
    %v850 = vsel %vm842, 1, 0
    %v851 = vsel %vm843, 1, 0
    %v852 = vsel %vm844, 1, 0
    %v853 = vsel %vm845, 1, 0
    %v854 = vsel %vm846, 1, 0
    %v855 = vsel %vm847, 1, 0
    %v856 = vsel %vm848, 1, 0
    %v857 = vcvt.s32.f32 %v849
    %v858 = vcvt.s32.f32 %v850
    %v859 = vcvt.s32.f32 %v851
    %v860 = vcvt.s32.f32 %v852
    %v861 = vcvt.s32.f32 %v853
    %v862 = vcvt.s32.f32 %v854
    %v863 = vcvt.s32.f32 %v855
    %v864 = vcvt.s32.f32 %v856
    %v865 = vadd.f32 %v833, %v857
    %v866 = vadd.f32 %v834, %v858
    %v867 = vadd.f32 %v835, %v859
    %v868 = vadd.f32 %v836, %v860
    %v869 = vadd.f32 %v837, %v861
    %v870 = vadd.f32 %v838, %v862
    %v871 = vadd.f32 %v839, %v863
    %v872 = vadd.f32 %v840, %v864
    %vm873 = vcmp.lt.f32.partialorder %v85, %v644
    %vm874 = vcmp.lt.f32.partialorder %v152, %v648
    %vm875 = vcmp.lt.f32.partialorder %v219, %v652
    %vm876 = vcmp.lt.f32.partialorder %v286, %v656
    %vm877 = vcmp.lt.f32.partialorder %v353, %v660
    %vm878 = vcmp.lt.f32.partialorder %v420, %v664
    %vm879 = vcmp.lt.f32.partialorder %v487, %v668
    %vm880 = vcmp.lt.f32.partialorder %v554, %v672
    %v881 = vsel %vm873, 1, 0
    %v882 = vsel %vm874, 1, 0
    %v883 = vsel %vm875, 1, 0
    %v884 = vsel %vm876, 1, 0
    %v885 = vsel %vm877, 1, 0
    %v886 = vsel %vm878, 1, 0
    %v887 = vsel %vm879, 1, 0
    %v888 = vsel %vm880, 1, 0
    %v889 = vcvt.s32.f32 %v881
    %v890 = vcvt.s32.f32 %v882
    %v891 = vcvt.s32.f32 %v883
    %v892 = vcvt.s32.f32 %v884
    %v893 = vcvt.s32.f32 %v885
    %v894 = vcvt.s32.f32 %v886
    %v895 = vcvt.s32.f32 %v887
    %v896 = vcvt.s32.f32 %v888
    %v897 = vadd.f32 %v865, %v889
    %v898 = vadd.f32 %v866, %v890
    %v899 = vadd.f32 %v867, %v891
    %v900 = vadd.f32 %v868, %v892
    %v901 = vadd.f32 %v869, %v893
    %v902 = vadd.f32 %v870, %v894
    %v903 = vadd.f32 %v871, %v895
    %v904 = vadd.f32 %v872, %v896
    %vm905 = vcmp.lt.f32.partialorder %v89, %v644
    %vm906 = vcmp.lt.f32.partialorder %v156, %v648
    %vm907 = vcmp.lt.f32.partialorder %v223, %v652
    %vm908 = vcmp.lt.f32.partialorder %v290, %v656
    %vm909 = vcmp.lt.f32.partialorder %v357, %v660
    %vm910 = vcmp.lt.f32.partialorder %v424, %v664
    %vm911 = vcmp.lt.f32.partialorder %v491, %v668
    %vm912 = vcmp.lt.f32.partialorder %v558, %v672
    %v913 = vsel %vm905, 1, 0
    %v914 = vsel %vm906, 1, 0
    %v915 = vsel %vm907, 1, 0
    %v916 = vsel %vm908, 1, 0
    %v917 = vsel %vm909, 1, 0
    %v918 = vsel %vm910, 1, 0
    %v919 = vsel %vm911, 1, 0
    %v920 = vsel %vm912, 1, 0
    %v921 = vcvt.s32.f32 %v913
    %v922 = vcvt.s32.f32 %v914
    %v923 = vcvt.s32.f32 %v915
    %v924 = vcvt.s32.f32 %v916
    %v925 = vcvt.s32.f32 %v917
    %v926 = vcvt.s32.f32 %v918
    %v927 = vcvt.s32.f32 %v919
    %v928 = vcvt.s32.f32 %v920
    %v929 = vadd.f32 %v897, %v921
    %v930 = vadd.f32 %v898, %v922
    %v931 = vadd.f32 %v899, %v923
    %v932 = vadd.f32 %v900, %v924
    %v933 = vadd.f32 %v901, %v925
    %v934 = vadd.f32 %v902, %v926
    %v935 = vadd.f32 %v903, %v927
    %v936 = vadd.f32 %v904, %v928
    %vm937 = vcmp.lt.f32.partialorder %v93, %v644
    %vm938 = vcmp.lt.f32.partialorder %v160, %v648
    %vm939 = vcmp.lt.f32.partialorder %v227, %v652
    %vm940 = vcmp.lt.f32.partialorder %v294, %v656
    %vm941 = vcmp.lt.f32.partialorder %v361, %v660
    %vm942 = vcmp.lt.f32.partialorder %v428, %v664
    %vm943 = vcmp.lt.f32.partialorder %v495, %v668
    %vm944 = vcmp.lt.f32.partialorder %v562, %v672
    %v945 = vsel %vm937, 1, 0
    %v946 = vsel %vm938, 1, 0
    %v947 = vsel %vm939, 1, 0
    %v948 = vsel %vm940, 1, 0
    %v949 = vsel %vm941, 1, 0
    %v950 = vsel %vm942, 1, 0
    %v951 = vsel %vm943, 1, 0
    %v952 = vsel %vm944, 1, 0
    %v953 = vcvt.s32.f32 %v945
    %v954 = vcvt.s32.f32 %v946
    %v955 = vcvt.s32.f32 %v947
    %v956 = vcvt.s32.f32 %v948
    %v957 = vcvt.s32.f32 %v949
    %v958 = vcvt.s32.f32 %v950
    %v959 = vcvt.s32.f32 %v951
    %v960 = vcvt.s32.f32 %v952
    %v961 = vadd.f32 %v929, %v953
    %v962 = vadd.f32 %v930, %v954
    %v963 = vadd.f32 %v931, %v955
    %v964 = vadd.f32 %v932, %v956
    %v965 = vadd.f32 %v933, %v957
    %v966 = vadd.f32 %v934, %v958
    %v967 = vadd.f32 %v935, %v959
    %v968 = vadd.f32 %v936, %v960
    %vm969 = vcmp.lt.f32.partialorder %v97, %v644
    %vm970 = vcmp.lt.f32.partialorder %v164, %v648
    %vm971 = vcmp.lt.f32.partialorder %v231, %v652
    %vm972 = vcmp.lt.f32.partialorder %v298, %v656
    %vm973 = vcmp.lt.f32.partialorder %v365, %v660
    %vm974 = vcmp.lt.f32.partialorder %v432, %v664
    %vm975 = vcmp.lt.f32.partialorder %v499, %v668
    %vm976 = vcmp.lt.f32.partialorder %v566, %v672
    %v977 = vsel %vm969, 1, 0
    %v978 = vsel %vm970, 1, 0
    %v979 = vsel %vm971, 1, 0
    %v980 = vsel %vm972, 1, 0
    %v981 = vsel %vm973, 1, 0
    %v982 = vsel %vm974, 1, 0
    %v983 = vsel %vm975, 1, 0
    %v984 = vsel %vm976, 1, 0
    %v985 = vcvt.s32.f32 %v977
    %v986 = vcvt.s32.f32 %v978
    %v987 = vcvt.s32.f32 %v979
    %v988 = vcvt.s32.f32 %v980
    %v989 = vcvt.s32.f32 %v981
    %v990 = vcvt.s32.f32 %v982
    %v991 = vcvt.s32.f32 %v983
    %v992 = vcvt.s32.f32 %v984
    %v993 = vadd.f32 %v961, %v985
    %v994 = vadd.f32 %v962, %v986
    %v995 = vadd.f32 %v963, %v987
    %v996 = vadd.f32 %v964, %v988
    %v997 = vadd.f32 %v965, %v989
    %v998 = vadd.f32 %v966, %v990
    %v999 = vadd.f32 %v967, %v991
    %v1000 = vadd.f32 %v968, %v992
    %vm1001 = vcmp.lt.f32.partialorder %v101, %v644
    %vm1002 = vcmp.lt.f32.partialorder %v168, %v648
    %vm1003 = vcmp.lt.f32.partialorder %v235, %v652
    %vm1004 = vcmp.lt.f32.partialorder %v302, %v656
    %vm1005 = vcmp.lt.f32.partialorder %v369, %v660
    %vm1006 = vcmp.lt.f32.partialorder %v436, %v664
    %vm1007 = vcmp.lt.f32.partialorder %v503, %v668
    %vm1008 = vcmp.lt.f32.partialorder %v570, %v672
    %v1009 = vsel %vm1001, 1, 0
    %v1010 = vsel %vm1002, 1, 0
    %v1011 = vsel %vm1003, 1, 0
    %v1012 = vsel %vm1004, 1, 0
    %v1013 = vsel %vm1005, 1, 0
    %v1014 = vsel %vm1006, 1, 0
    %v1015 = vsel %vm1007, 1, 0
    %v1016 = vsel %vm1008, 1, 0
    %v1017 = vcvt.s32.f32 %v1009
    %v1018 = vcvt.s32.f32 %v1010
    %v1019 = vcvt.s32.f32 %v1011
    %v1020 = vcvt.s32.f32 %v1012
    %v1021 = vcvt.s32.f32 %v1013
    %v1022 = vcvt.s32.f32 %v1014
    %v1023 = vcvt.s32.f32 %v1015
    %v1024 = vcvt.s32.f32 %v1016
    %v1025 = vadd.f32 %v993, %v1017
    %v1026 = vadd.f32 %v994, %v1018
    %v1027 = vadd.f32 %v995, %v1019
    %v1028 = vadd.f32 %v996, %v1020
    %v1029 = vadd.f32 %v997, %v1021
    %v1030 = vadd.f32 %v998, %v1022
    %v1031 = vadd.f32 %v999, %v1023
    %v1032 = vadd.f32 %v1000, %v1024
    %vm1033 = vcmp.lt.f32.partialorder %v105, %v644
    %vm1034 = vcmp.lt.f32.partialorder %v172, %v648
    %vm1035 = vcmp.lt.f32.partialorder %v239, %v652
    %vm1036 = vcmp.lt.f32.partialorder %v306, %v656
    %vm1037 = vcmp.lt.f32.partialorder %v373, %v660
    %vm1038 = vcmp.lt.f32.partialorder %v440, %v664
    %vm1039 = vcmp.lt.f32.partialorder %v507, %v668
    %vm1040 = vcmp.lt.f32.partialorder %v574, %v672
    %v1041 = vsel %vm1033, 1, 0
    %v1042 = vsel %vm1034, 1, 0
    %v1043 = vsel %vm1035, 1, 0
    %v1044 = vsel %vm1036, 1, 0
    %v1045 = vsel %vm1037, 1, 0
    %v1046 = vsel %vm1038, 1, 0
    %v1047 = vsel %vm1039, 1, 0
    %v1048 = vsel %vm1040, 1, 0
    %v1049 = vcvt.s32.f32 %v1041
    %v1050 = vcvt.s32.f32 %v1042
    %v1051 = vcvt.s32.f32 %v1043
    %v1052 = vcvt.s32.f32 %v1044
    %v1053 = vcvt.s32.f32 %v1045
    %v1054 = vcvt.s32.f32 %v1046
    %v1055 = vcvt.s32.f32 %v1047
    %v1056 = vcvt.s32.f32 %v1048
    %v1057 = vadd.f32 %v1025, %v1049
    %v1058 = vadd.f32 %v1026, %v1050
    %v1059 = vadd.f32 %v1027, %v1051
    %v1060 = vadd.f32 %v1028, %v1052
    %v1061 = vadd.f32 %v1029, %v1053
    %v1062 = vadd.f32 %v1030, %v1054
    %v1063 = vadd.f32 %v1031, %v1055
    %v1064 = vadd.f32 %v1032, %v1056
    %vm1065 = vcmp.lt.f32.partialorder %v109, %v644
    %vm1066 = vcmp.lt.f32.partialorder %v176, %v648
    %vm1067 = vcmp.lt.f32.partialorder %v243, %v652
    %vm1068 = vcmp.lt.f32.partialorder %v310, %v656
    %vm1069 = vcmp.lt.f32.partialorder %v377, %v660
    %vm1070 = vcmp.lt.f32.partialorder %v444, %v664
    %vm1071 = vcmp.lt.f32.partialorder %v511, %v668
    %vm1072 = vcmp.lt.f32.partialorder %v578, %v672
    %v1073 = vsel %vm1065, 1, 0
    %v1074 = vsel %vm1066, 1, 0
    %v1075 = vsel %vm1067, 1, 0
    %v1076 = vsel %vm1068, 1, 0
    %v1077 = vsel %vm1069, 1, 0
    %v1078 = vsel %vm1070, 1, 0
    %v1079 = vsel %vm1071, 1, 0
    %v1080 = vsel %vm1072, 1, 0
    %v1081 = vcvt.s32.f32 %v1073
    %v1082 = vcvt.s32.f32 %v1074
    %v1083 = vcvt.s32.f32 %v1075
    %v1084 = vcvt.s32.f32 %v1076
    %v1085 = vcvt.s32.f32 %v1077
    %v1086 = vcvt.s32.f32 %v1078
    %v1087 = vcvt.s32.f32 %v1079
    %v1088 = vcvt.s32.f32 %v1080
    %v1089 = vadd.f32 %v1057, %v1081
    %v1090 = vadd.f32 %v1058, %v1082
    %v1091 = vadd.f32 %v1059, %v1083
    %v1092 = vadd.f32 %v1060, %v1084
    %v1093 = vadd.f32 %v1061, %v1085
    %v1094 = vadd.f32 %v1062, %v1086
    %v1095 = vadd.f32 %v1063, %v1087
    %v1096 = vadd.f32 %v1064, %v1088
    %vm1097 = vcmp.lt.f32.partialorder %v113, %v644
    %vm1098 = vcmp.lt.f32.partialorder %v180, %v648
    %vm1099 = vcmp.lt.f32.partialorder %v247, %v652
    %vm1100 = vcmp.lt.f32.partialorder %v314, %v656
    %vm1101 = vcmp.lt.f32.partialorder %v381, %v660
    %vm1102 = vcmp.lt.f32.partialorder %v448, %v664
    %vm1103 = vcmp.lt.f32.partialorder %v515, %v668
    %vm1104 = vcmp.lt.f32.partialorder %v582, %v672
    %v1105 = vsel %vm1097, 1, 0
    %v1106 = vsel %vm1098, 1, 0
    %v1107 = vsel %vm1099, 1, 0
    %v1108 = vsel %vm1100, 1, 0
    %v1109 = vsel %vm1101, 1, 0
    %v1110 = vsel %vm1102, 1, 0
    %v1111 = vsel %vm1103, 1, 0
    %v1112 = vsel %vm1104, 1, 0
    %v1113 = vcvt.s32.f32 %v1105
    %v1114 = vcvt.s32.f32 %v1106
    %v1115 = vcvt.s32.f32 %v1107
    %v1116 = vcvt.s32.f32 %v1108
    %v1117 = vcvt.s32.f32 %v1109
    %v1118 = vcvt.s32.f32 %v1110
    %v1119 = vcvt.s32.f32 %v1111
    %v1120 = vcvt.s32.f32 %v1112
    %v1121 = vadd.f32 %v1089, %v1113
    %v1122 = vadd.f32 %v1090, %v1114
    %v1123 = vadd.f32 %v1091, %v1115
    %v1124 = vadd.f32 %v1092, %v1116
    %v1125 = vadd.f32 %v1093, %v1117
    %v1126 = vadd.f32 %v1094, %v1118
    %v1127 = vadd.f32 %v1095, %v1119
    %v1128 = vadd.f32 %v1096, %v1120
    %vm1129 = vcmp.lt.f32.partialorder %v117, %v644
    %vm1130 = vcmp.lt.f32.partialorder %v184, %v648
    %vm1131 = vcmp.lt.f32.partialorder %v251, %v652
    %vm1132 = vcmp.lt.f32.partialorder %v318, %v656
    %vm1133 = vcmp.lt.f32.partialorder %v385, %v660
    %vm1134 = vcmp.lt.f32.partialorder %v452, %v664
    %vm1135 = vcmp.lt.f32.partialorder %v519, %v668
    %vm1136 = vcmp.lt.f32.partialorder %v586, %v672
    %v1137 = vsel %vm1129, 1, 0
    %v1138 = vsel %vm1130, 1, 0
    %v1139 = vsel %vm1131, 1, 0
    %v1140 = vsel %vm1132, 1, 0
    %v1141 = vsel %vm1133, 1, 0
    %v1142 = vsel %vm1134, 1, 0
    %v1143 = vsel %vm1135, 1, 0
    %v1144 = vsel %vm1136, 1, 0
    %v1145 = vcvt.s32.f32 %v1137
    %v1146 = vcvt.s32.f32 %v1138
    %v1147 = vcvt.s32.f32 %v1139
    %v1148 = vcvt.s32.f32 %v1140
    %v1149 = vcvt.s32.f32 %v1141
    %v1150 = vcvt.s32.f32 %v1142
    %v1151 = vcvt.s32.f32 %v1143
    %v1152 = vcvt.s32.f32 %v1144
    %v1153 = vadd.f32 %v1121, %v1145
    %v1154 = vadd.f32 %v1122, %v1146
    %v1155 = vadd.f32 %v1123, %v1147
    %v1156 = vadd.f32 %v1124, %v1148
    %v1157 = vadd.f32 %v1125, %v1149
    %v1158 = vadd.f32 %v1126, %v1150
    %v1159 = vadd.f32 %v1127, %v1151
    %v1160 = vadd.f32 %v1128, %v1152
    %vm1161 = vcmp.lt.f32.partialorder %v121, %v644
    %vm1162 = vcmp.lt.f32.partialorder %v188, %v648
    %vm1163 = vcmp.lt.f32.partialorder %v255, %v652
    %vm1164 = vcmp.lt.f32.partialorder %v322, %v656
    %vm1165 = vcmp.lt.f32.partialorder %v389, %v660
    %vm1166 = vcmp.lt.f32.partialorder %v456, %v664
    %vm1167 = vcmp.lt.f32.partialorder %v523, %v668
    %vm1168 = vcmp.lt.f32.partialorder %v590, %v672
    %v1169 = vsel %vm1161, 1, 0
    %v1170 = vsel %vm1162, 1, 0
    %v1171 = vsel %vm1163, 1, 0
    %v1172 = vsel %vm1164, 1, 0
    %v1173 = vsel %vm1165, 1, 0
    %v1174 = vsel %vm1166, 1, 0
    %v1175 = vsel %vm1167, 1, 0
    %v1176 = vsel %vm1168, 1, 0
    %v1177 = vcvt.s32.f32 %v1169
    %v1178 = vcvt.s32.f32 %v1170
    %v1179 = vcvt.s32.f32 %v1171
    %v1180 = vcvt.s32.f32 %v1172
    %v1181 = vcvt.s32.f32 %v1173
    %v1182 = vcvt.s32.f32 %v1174
    %v1183 = vcvt.s32.f32 %v1175
    %v1184 = vcvt.s32.f32 %v1176
    %v1185 = vadd.f32 %v1153, %v1177
    %v1186 = vadd.f32 %v1154, %v1178
    %v1187 = vadd.f32 %v1155, %v1179
    %v1188 = vadd.f32 %v1156, %v1180
    %v1189 = vadd.f32 %v1157, %v1181
    %v1190 = vadd.f32 %v1158, %v1182
    %v1191 = vadd.f32 %v1159, %v1183
    %v1192 = vadd.f32 %v1160, %v1184
    %v1193 = vrot.slane %v1185, 4
    %v1194 = vadd.f32 %v1185, %v1193
    %v1195 = vrot.slane %v1194, 2
    %v1196 = vadd.f32 %v1194, %v1195
    %v1197 = vrot.slane %v1196, 1
    %v1198 = vadd.f32 %v1196, %v1197
    %v1199 = vrot.slane %v1186, 4
    %v1200 = vadd.f32 %v1186, %v1199
    %v1201 = vrot.slane %v1200, 2
    %v1202 = vadd.f32 %v1200, %v1201
    %v1203 = vrot.slane %v1202, 1
    %v1204 = vadd.f32 %v1202, %v1203
    %v1205 = vrot.slane %v1187, 4
    %v1206 = vadd.f32 %v1187, %v1205
    %v1207 = vrot.slane %v1206, 2
    %v1208 = vadd.f32 %v1206, %v1207
    %v1209 = vrot.slane %v1208, 1
    %v1210 = vadd.f32 %v1208, %v1209
    %v1211 = vrot.slane %v1188, 4
    %v1212 = vadd.f32 %v1188, %v1211
    %v1213 = vrot.slane %v1212, 2
    %v1214 = vadd.f32 %v1212, %v1213
    %v1215 = vrot.slane %v1214, 1
    %v1216 = vadd.f32 %v1214, %v1215
    %v1217 = vrot.slane %v1189, 4
    %v1218 = vadd.f32 %v1189, %v1217
    %v1219 = vrot.slane %v1218, 2
    %v1220 = vadd.f32 %v1218, %v1219
    %v1221 = vrot.slane %v1220, 1
    %v1222 = vadd.f32 %v1220, %v1221
    %v1223 = vrot.slane %v1190, 4
    %v1224 = vadd.f32 %v1190, %v1223
    %v1225 = vrot.slane %v1224, 2
    %v1226 = vadd.f32 %v1224, %v1225
    %v1227 = vrot.slane %v1226, 1
    %v1228 = vadd.f32 %v1226, %v1227
    %v1229 = vrot.slane %v1191, 4
    %v1230 = vadd.f32 %v1191, %v1229
    %v1231 = vrot.slane %v1230, 2
    %v1232 = vadd.f32 %v1230, %v1231
    %v1233 = vrot.slane %v1232, 1
    %v1234 = vadd.f32 %v1232, %v1233
    %v1235 = vrot.slane %v1192, 4
    %v1236 = vadd.f32 %v1192, %v1235
    %v1237 = vrot.slane %v1236, 2
    %v1238 = vadd.f32 %v1236, %v1237
    %v1239 = vrot.slane %v1238, 1
    %v1240 = vadd.f32 %v1238, %v1239
    %v1241 = vmul.f32 %v52, 95.0
    %v1242 = vfloor.f32 %v1241
    %v1243 = vsub.f32 %v1241, %v1242
    %v1244 = vceil.f32 %v1241
    %v1245 = vmin.f32 %v1244, 95.0
    %v1247 = vrot.slane %v1242, 1
    %v1248 = vrot.slane %v1242, 2
    %v1249 = vrot.slane %v1242, 3
    %v1250 = vrot.slane %v1242, 4
    %v1251 = vrot.slane %v1242, 5
    %v1252 = vrot.slane %v1242, 6
    %v1253 = vrot.slane %v1242, 7
    %vm1262 = vcmp.le.f32.partialorder %v1198, %v1242
    %vm1263 = vcmp.le.f32.partialorder %v1204, %v1247
    %vm1264 = vcmp.le.f32.partialorder %v1210, %v1248
    %vm1265 = vcmp.le.f32.partialorder %v1216, %v1249
    %vm1266 = vcmp.le.f32.partialorder %v1222, %v1250
    %vm1267 = vcmp.le.f32.partialorder %v1228, %v1251
    %vm1268 = vcmp.le.f32.partialorder %v1234, %v1252
    %vm1269 = vcmp.le.f32.partialorder %v1240, %v1253
    %v1270 = vrot.slane %v54, 1
    %v1271 = vrot.slane %v54, 2
    %v1272 = vrot.slane %v54, 3
    %v1273 = vrot.slane %v54, 4
    %v1274 = vrot.slane %v54, 5
    %v1275 = vrot.slane %v54, 6
    %v1276 = vrot.slane %v54, 7
    %v1285 = vsel %vm1262, %v54, -1e+30
    %v1286 = vsel %vm1263, %v1270, -1e+30
    %v1287 = vsel %vm1264, %v1271, -1e+30
    %v1288 = vsel %vm1265, %v1272, -1e+30
    %v1289 = vsel %vm1266, %v1273, -1e+30
    %v1290 = vsel %vm1267, %v1274, -1e+30
    %v1291 = vsel %vm1268, %v1275, -1e+30
    %v1292 = vsel %vm1269, %v1276, -1e+30
    %v1301 = vrot.slane %v1286, 7
    %vm1302 = vcmask 1041409
    %v1303 = vsel %vm1302, %v1301, %v1285
    %v1304 = vrot.slane %v1287, 6
    %vm1305 = vcmask 1042434
    %v1306 = vsel %vm1305, %v1304, %v1303
    %v1307 = vrot.slane %v1288, 5
    %vm1308 = vcmask 1043459
    %v1309 = vsel %vm1308, %v1307, %v1306
    %v1310 = vrot.slane %v1289, 4
    %vm1311 = vcmask 1044484
    %v1312 = vsel %vm1311, %v1310, %v1309
    %v1313 = vrot.slane %v1290, 3
    %vm1314 = vcmask 1045509
    %v1315 = vsel %vm1314, %v1313, %v1312
    %v1316 = vrot.slane %v1291, 2
    %vm1317 = vcmask 1046534
    %v1318 = vsel %vm1317, %v1316, %v1315
    %v1319 = vrot.slane %v1292, 1
    %vm1320 = vcmask 1047559
    %v1321 = vsel %vm1320, %v1319, %v1318
    %1323 = vmax.xlane.f32.xlu0 %v1321
    %v1324 = vpop.xlane.xlu0 %1323
    %v1326 = vrot.slane %v1245, 1
    %v1327 = vrot.slane %v1245, 2
    %v1328 = vrot.slane %v1245, 3
    %v1329 = vrot.slane %v1245, 4
    %v1330 = vrot.slane %v1245, 5
    %v1331 = vrot.slane %v1245, 6
    %v1332 = vrot.slane %v1245, 7
    %vm1341 = vcmp.le.f32.partialorder %v1198, %v1245
    %vm1342 = vcmp.le.f32.partialorder %v1204, %v1326
    %vm1343 = vcmp.le.f32.partialorder %v1210, %v1327
    %vm1344 = vcmp.le.f32.partialorder %v1216, %v1328
    %vm1345 = vcmp.le.f32.partialorder %v1222, %v1329
    %vm1346 = vcmp.le.f32.partialorder %v1228, %v1330
    %vm1347 = vcmp.le.f32.partialorder %v1234, %v1331
    %vm1348 = vcmp.le.f32.partialorder %v1240, %v1332
    %v1349 = vsel %vm1341, %v54, -1e+30
    %v1350 = vsel %vm1342, %v1270, -1e+30
    %v1351 = vsel %vm1343, %v1271, -1e+30
    %v1352 = vsel %vm1344, %v1272, -1e+30
    %v1353 = vsel %vm1345, %v1273, -1e+30
    %v1354 = vsel %vm1346, %v1274, -1e+30
    %v1355 = vsel %vm1347, %v1275, -1e+30
    %v1356 = vsel %vm1348, %v1276, -1e+30
    %v1365 = vrot.slane %v1350, 7
    %v1366 = vsel %vm1302, %v1365, %v1349
    %v1367 = vrot.slane %v1351, 6
    %v1368 = vsel %vm1305, %v1367, %v1366
    %v1369 = vrot.slane %v1352, 5
    %v1370 = vsel %vm1308, %v1369, %v1368
    %v1371 = vrot.slane %v1353, 4
    %v1372 = vsel %vm1311, %v1371, %v1370
    %v1373 = vrot.slane %v1354, 3
    %v1374 = vsel %vm1314, %v1373, %v1372
    %v1375 = vrot.slane %v1355, 2
    %v1376 = vsel %vm1317, %v1375, %v1374
    %v1377 = vrot.slane %v1356, 1
    %v1378 = vsel %vm1320, %v1377, %v1376
    %1380 = vmax.xlane.f32.xlu0 %v1378
    %v1381 = vpop.xlane.xlu0 %1380
    %v1382 = vsub.f32 %v1381, %v1324
    %v1383 = vmul.f32 %v1243, %v1382
    %v1384 = vadd.f32 %v1324, %v1383
    %v1385 = vsub.f32 0.0, %v1384
    %v1386 = vadd.f32 %v1385, 1e-08
    %v1387 = vadd.f32 %v33, %v1386
    %v1388 = vmax.f32 %v1387, 0.0
    %v1389 = vadd.f32 %v1388, 1e-08
    %v1390 = vlog2.pop %v1389
    %v1391 = vmul.f32 %v1390, 0.6931472
    %v1392 = vadd.f32 %v33, %v1391
    %v1393 = vsel %vm29, %v1392, -1e+30
    %1394 = vmax.xlane.f32.xlu0 %v1393
    %v1395 = vpop.xlane.xlu0 %1394
    %v1396 = vsub.f32 %v1393, %v1395
    %v1397 = vmul.f32 %v1396, 1.442695
    %v1398 = vpow.pop %v1397
    %v1399 = vsel %vm29, %v1398, 0.0
    %1400 = vadd.xlane.f32.xlu0 %v1399
    %v1401 = vpop.xlane.xlu0 %1400
    %v1402 = vrcp.pop %v1401
    %v1403 = vmul.f32 %v1399, %v1402
    %1404 = vst [vmem:[#allocation6] sm:$0xff] %v1403
    // Predicated region
    $region14: #{tpu_custom_call.1} parent=1 // pred_check
      _
    $region15: #{tpu_custom_call.1} parent=1 // pred_check_branch
      %1406 = sbr.rel (0) target = $region17
    $region16: #{tpu_custom_call.1} parent=1 // pred_region
      %s1408 = ssub.s32 128, 128
      %1409 = vsyncadd [#allocation5], %s1408
      %s1411 = sshll.u32 [#allocation6], 4
      %s1412 = int_to_ptr.vmem [resolvable:$true] %s1411
      %1414 = dma.vmem_to_hbm [thread:$0]  %s1412, 128, %s2, [#allocation5]
    $region17: #{tpu_custom_call.1} parent=1 // pred_fallthru
      _
    // Predicated region
    $region18: #{tpu_custom_call.1} parent=1 // pred_check
      _
    $region19: #{tpu_custom_call.1} parent=1 // pred_check_branch
      %1416 = sbr.rel (0) target = $region21
    $region20: #{tpu_custom_call.1} parent=1 // pred_region
      %1417 = dma.done [#allocation5], 128
    $region21: #{tpu_custom_call.1} parent=1 // pred_fallthru
      _
    %1418 = vsyncpa [#allocation4], 1
    %1419 = vsyncpa [#allocation5], 1

</llo_original>
